<compile_context>
chip_gen: v6e
topology: v6e:2x2x1
jax: 0.10.0
libtpu: 0.0.40
codegen_flags: <defaults>
</compile_context>

<pallas_src>
import math

import jax
import jax.numpy as jnp
import numpy as np
from jax.experimental import pallas as pl
from jax.experimental.pallas import tpu as pltpu

# ---- model hyperparameters (small, consistent with the module) ----
BATCH = 2
SEQ = 8
DIM = 32
N_HEADS = 4
N_KV_HEADS = 2
HEAD_DIM = DIM // N_HEADS              # 8
Q_WIDTH = N_HEADS * HEAD_DIM           # 32
KV_WIDTH = N_KV_HEADS * HEAD_DIM       # 16
GROUP = N_HEADS // N_KV_HEADS          # 2
NORM_EPS = 1e-6
ROPE_THETA = 10000.0


def _rms_norm(v, w, eps):
    var = jnp.mean(v * v, axis=-1, keepdims=True)
    return v * jax.lax.rsqrt(var + eps) * w


def make_attention_kernel(nb, seq):
    """Build the kernel body; `nb` = batch elements handled per grid step."""
    scale = 1.0 / math.sqrt(HEAD_DIM)

    def kernel(x_ref, cq_ref, sq_ref, rq_ref, ck_ref, sk_ref, rk_ref,
               wq_ref, wk_ref, wv_ref, wo_ref, qn_ref, kn_ref, out_ref):
        x = x_ref[...].astype(jnp.float32)                                  # (nb*S, D)

        # ---- QKV projections once on the whole slab (one MXU push each) ----
        xq = jnp.dot(x, wq_ref[...], preferred_element_type=jnp.float32)   # (nb*S, Q_WIDTH)
        xk = jnp.dot(x, wk_ref[...], preferred_element_type=jnp.float32)   # (nb*S, KV_WIDTH)
        xv = jnp.dot(x, wv_ref[...], preferred_element_type=jnp.float32)   # (nb*S, KV_WIDTH)

        # ---- OLMo2 q/k RMSNorm over the full projected width ----
        xq = _rms_norm(xq, qn_ref[...], NORM_EPS)
        xk = _rms_norm(xk, kn_ref[...], NORM_EPS)

        # ---- full-width interleaved-pair RoPE:  out = x*cos + (x @ R_blockdiag)*sin ----
        xq = xq * cq_ref[...] + jnp.dot(
            xq, rq_ref[...], preferred_element_type=jnp.float32) * sq_ref[...]
        xk = xk * ck_ref[...] + jnp.dot(
            xk, rk_ref[...], preferred_element_type=jnp.float32) * sk_ref[...]

        # ---- attention: per (batch, kv head); GROUP q heads stacked along sublanes ----
        for b in range(nb):
            r0 = b * seq
            proj = jnp.zeros((seq, DIM), jnp.float32)
            for g in range(N_KV_HEADS):
                k_g = xk[r0:r0 + seq, g * HEAD_DIM:(g + 1) * HEAD_DIM]      # (S, Dh)
                v_g = xv[r0:r0 + seq, g * HEAD_DIM:(g + 1) * HEAD_DIM]      # (S, Dh)
                q_stack = jnp.concatenate(
                    [xq[r0:r0 + seq, h * HEAD_DIM:(h + 1) * HEAD_DIM]
                     for h in range(g * GROUP, (g + 1) * GROUP)], axis=0)   # (GROUP*S, Dh)

                scores = jax.lax.dot_general(
                    q_stack, k_g, (((1,), (1,)), ((), ())),
                    preferred_element_type=jnp.float32) * scale             # (GROUP*S, S)
                m = jnp.max(scores, axis=-1, keepdims=True)
                p = jnp.exp(scores - m)
                denom = jnp.sum(p, axis=-1, keepdims=True)
                p = p * pl.reciprocal(denom, approx=False)                  # EUP, exact
                o_stack = jnp.dot(p, v_g, preferred_element_type=jnp.float32)  # (GROUP*S, Dh)

                # per-head Wo accumulation (no lane-axis concat of head outputs)
                for hq in range(GROUP):
                    h = g * GROUP + hq
                    o_h = o_stack[hq * seq:(hq + 1) * seq, :]               # (S, Dh)
                    proj = proj + jnp.dot(
                        o_h, wo_ref[h * HEAD_DIM:(h + 1) * HEAD_DIM, :],
                        preferred_element_type=jnp.float32)
            out_ref[r0:r0 + seq, :] = proj.astype(out_ref.dtype)

    return kernel


def make_rope_tables(seq_len, head_dim, n_heads, theta):
    """Full-projected-width RoPE tables: lane-tiled cos/sin and a block-diagonal
    pair-rotation matrix R with (x @ R)[2i] = -x[2i+1], (x @ R)[2i+1] = x[2i]."""
    half = head_dim // 2
    inv_freq = 1.0 / (theta ** (np.arange(0, half, dtype=np.float32) * 2.0 / head_dim))
    idx = np.arange(seq_len, dtype=np.float32)[:, None] * inv_freq[None, :]   # (S, Dh/2)
    cos = np.repeat(np.cos(idx), 2, axis=-1)                                  # (S, Dh)
    sin = np.repeat(np.sin(idx), 2, axis=-1)
    r = np.zeros((head_dim, head_dim), np.float32)
    for i in range(half):
        r[2 * i + 1, 2 * i] = -1.0
        r[2 * i, 2 * i + 1] = 1.0
    cos_full = np.tile(cos, (1, n_heads))                                     # (S, n_heads*Dh)
    sin_full = np.tile(sin, (1, n_heads))
    rot_full = np.kron(np.eye(n_heads, dtype=np.float32), r)                  # block-diagonal
    return jnp.asarray(cos_full), jnp.asarray(sin_full), jnp.asarray(rot_full)


def olmo2_attention(x, params):
    B, S, D = x.shape

    # v7x has two TensorCores per chip: keep a parallel batch grid so each core takes
    # one batch element.  Single-TC chips (v5e/v6e): fuse the whole batch into one
    # grid step to avoid per-step pipeline overhead (~0.35 us each).
    try:
        two_tc = "v7" in jax.devices()[0].device_kind.lower()
    except Exception:  # pragma: no cover
        two_tc = False
    nb = 1 if (two_tc and B > 1) else B            # batch elements per grid step
    grid = (B // nb,)

    cos_q, sin_q, rot_q = make_rope_tables(S, HEAD_DIM, N_HEADS, ROPE_THETA)
    cos_k, sin_k, rot_k = make_rope_tables(S, HEAD_DIM, N_KV_HEADS, ROPE_THETA)
    # sublane-tile cos/sin so they match an (nb*S, width) slab (positions repeat per batch)
    cos_q = jnp.tile(cos_q, (nb, 1)); sin_q = jnp.tile(sin_q, (nb, 1))
    cos_k = jnp.tile(cos_k, (nb, 1)); sin_k = jnp.tile(sin_k, (nb, 1))

    x2 = x.reshape(B * S, D)

    def full_spec(a):
        n = a.ndim
        return pl.BlockSpec(a.shape, lambda i: (0,) * n)

    consts = (cos_q, sin_q, rot_q, cos_k, sin_k, rot_k,
              params["wq"], params["wk"], params["wv"], params["wo"],
              params["q_norm"], params["k_norm"])

    in_specs = [pl.BlockSpec((nb * S, D), lambda i: (i, 0))] + [full_spec(a) for a in consts]

    # advisory cost estimate for XLA scheduling around the kernel
    flops = 2 * B * S * (D * (Q_WIDTH + 2 * KV_WIDTH)      # qkv projections
                         + Q_WIDTH * Q_WIDTH + KV_WIDTH * KV_WIDTH   # rope rotations
                         + Q_WIDTH * D)                    # wo
    flops += 2 * 2 * B * N_HEADS * S * S * HEAD_DIM        # scores + PV
    bytes_accessed = 4 * (x2.size + sum(int(a.size) for a in consts) + B * S * D)
    cost = pl.CostEstimate(flops=flops,
                           transcendentals=B * N_HEADS * S * S,
                           bytes_accessed=bytes_accessed)

    out = pl.pallas_call(
        make_attention_kernel(nb, S),
        out_shape=jax.ShapeDtypeStruct((B * S, D), jnp.float32),
        grid=grid,
        in_specs=in_specs,
        out_specs=pl.BlockSpec((nb * S, D), lambda i: (i, 0)),
        compiler_params=pltpu.CompilerParams(dimension_semantics=("parallel",)),
        cost_estimate=cost,
    )(x2, *consts)
    return out.reshape(B, S, D)


# ------------------------- pure-JAX reference (sanity) -------------------------
def olmo2_attention_ref(x, params):
    B, S, _ = x.shape
    half = HEAD_DIM // 2
    inv_freq = 1.0 / (ROPE_THETA ** (jnp.arange(0, half, dtype=jnp.float32) * 2.0 / HEAD_DIM))
    idx = jnp.arange(S, dtype=jnp.float32)[:, None] * inv_freq[None, :]       # (S, Dh/2)
    cos = jnp.cos(idx)[None, :, None, :]
    sin = jnp.sin(idx)[None, :, None, :]

    def rms(v, w):
        return v * jax.lax.rsqrt(jnp.mean(v * v, axis=-1, keepdims=True) + NORM_EPS) * w

    xq = rms(x @ params["wq"], params["q_norm"])
    xk = rms(x @ params["wk"], params["k_norm"])
    xv = x @ params["wv"]
    xq = xq.reshape(B, S, N_HEADS, HEAD_DIM)
    xk = xk.reshape(B, S, N_KV_HEADS, HEAD_DIM)
    xv = xv.reshape(B, S, N_KV_HEADS, HEAD_DIM)

    def rope(t):  # torchtune interleaved-pair RoPE
        e = t.reshape(*t.shape[:-1], half, 2)
        o0 = e[..., 0] * cos - e[..., 1] * sin
        o1 = e[..., 1] * cos + e[..., 0] * sin
        return jnp.stack([o0, o1], axis=-1).reshape(t.shape)

    xq, xk = rope(xq), rope(xk)
    xk = jnp.repeat(xk, GROUP, axis=2)
    xv = jnp.repeat(xv, GROUP, axis=2)
    scores = jnp.einsum("bqhd,bkhd->bhqk", xq, xk) / math.sqrt(HEAD_DIM)
    probs = jax.nn.softmax(scores, axis=-1)
    attn = jnp.einsum("bhqk,bkhd->bqhd", probs, xv).reshape(B, S, Q_WIDTH)
    return attn @ params["wo"]


if __name__ == "__main__":
    key = jax.random.PRNGKey(0)
    ks = jax.random.split(key, 8)

    def w(k, shape, scale=0.05):
        return jax.random.normal(k, shape, jnp.float32) * scale

    # Linear weights pre-transposed to (in_features, out_features); no biases
    # (attn_proj_bias=False, wo bias=False). Norm weights kept 2D (1, dim).
    params = {
        "wq": w(ks[0], (DIM, Q_WIDTH)),
        "wk": w(ks[1], (DIM, KV_WIDTH)),
        "wv": w(ks[2], (DIM, KV_WIDTH)),
        "wo": w(ks[3], (Q_WIDTH, DIM)),
        "q_norm": 1.0 + w(ks[4], (1, Q_WIDTH), 0.02),
        "k_norm": 1.0 + w(ks[5], (1, KV_WIDTH), 0.02),
    }

    x = jax.random.normal(ks[6], (BATCH, SEQ, DIM), jnp.float32)

    out = olmo2_attention(x, params)
    out = jax.block_until_ready(out)

    ref = olmo2_attention_ref(x, params)
    assert out.shape == (BATCH, SEQ, DIM)
    err = float(jnp.max(jnp.abs(out - ref)))
    assert jnp.allclose(out, ref, rtol=1e-4, atol=1e-4), err

    print("KERNEL_OK")
</pallas_src>

<mosaic_0001>
module attributes {stable_mosaic.version = 11 : i64} {
  func.func @kernel(%arg0: i32, %arg1: memref<16x32xf32, #tpu.memory_space<vmem>>, %arg2: memref<16x32xf32, #tpu.memory_space<vmem>>, %arg3: memref<16x32xf32, #tpu.memory_space<vmem>>, %arg4: memref<32x32xf32, #tpu.memory_space<vmem>>, %arg5: memref<16x16xf32, #tpu.memory_space<vmem>>, %arg6: memref<16x16xf32, #tpu.memory_space<vmem>>, %arg7: memref<16x16xf32, #tpu.memory_space<vmem>>, %arg8: memref<32x32xf32, #tpu.memory_space<vmem>>, %arg9: memref<32x16xf32, #tpu.memory_space<vmem>>, %arg10: memref<32x16xf32, #tpu.memory_space<vmem>>, %arg11: memref<32x32xf32, #tpu.memory_space<vmem>>, %arg12: memref<1x32xf32, #tpu.memory_space<vmem>>, %arg13: memref<1x16xf32, #tpu.memory_space<vmem>>, %arg14: memref<16x32xf32, #tpu.memory_space<vmem>>) attributes {dimension_semantics = [#tpu.dimension_semantics<parallel>], iteration_bounds = array<i64: 1>, scalar_prefetch = 0 : i64, scratch_operands = 0 : i64, tpu.core_type = #tpu.core_type<tc>, window_params = [{transform_indices = @transform_0, window_bounds = array<i64: 16, 32>}, {pipeline_mode = #tpu.pipeline_mode<synchronous>, transform_indices = @transform_1, window_bounds = array<i64: 16, 32>}, {pipeline_mode = #tpu.pipeline_mode<synchronous>, transform_indices = @transform_2, window_bounds = array<i64: 16, 32>}, {pipeline_mode = #tpu.pipeline_mode<synchronous>, transform_indices = @transform_3, window_bounds = array<i64: 32, 32>}, {pipeline_mode = #tpu.pipeline_mode<synchronous>, transform_indices = @transform_4, window_bounds = array<i64: 16, 16>}, {pipeline_mode = #tpu.pipeline_mode<synchronous>, transform_indices = @transform_5, window_bounds = array<i64: 16, 16>}, {pipeline_mode = #tpu.pipeline_mode<synchronous>, transform_indices = @transform_6, window_bounds = array<i64: 16, 16>}, {pipeline_mode = #tpu.pipeline_mode<synchronous>, transform_indices = @transform_7, window_bounds = array<i64: 32, 32>}, {pipeline_mode = #tpu.pipeline_mode<synchronous>, transform_indices = @transform_8, window_bounds = array<i64: 32, 16>}, {pipeline_mode = #tpu.pipeline_mode<synchronous>, transform_indices = @transform_9, window_bounds = array<i64: 32, 16>}, {pipeline_mode = #tpu.pipeline_mode<synchronous>, transform_indices = @transform_10, window_bounds = array<i64: 32, 32>}, {pipeline_mode = #tpu.pipeline_mode<synchronous>, transform_indices = @transform_11, window_bounds = array<i64: 1, 32>}, {pipeline_mode = #tpu.pipeline_mode<synchronous>, transform_indices = @transform_12, window_bounds = array<i64: 1, 16>}, {transform_indices = @transform_13, window_bounds = array<i64: 16, 32>}]} {
    %c0 = arith.constant 0 : index
    %c0_0 = arith.constant 0 : index
    %0 = vector.load %arg1[%c0, %c0_0] : memref<16x32xf32, #tpu.memory_space<vmem>>, vector<16x32xf32>
    %c0_1 = arith.constant 0 : index
    %c0_2 = arith.constant 0 : index
    %1 = vector.load %arg8[%c0_1, %c0_2] : memref<32x32xf32, #tpu.memory_space<vmem>>, vector<32x32xf32>
    %cst = arith.constant dense<0.000000e+00> : vector<16x32xf32>
    %2 = tpu.matmul %0, %1, %cst {dimension_numbers = #tpu.dot_dimension_numbers<[1], [0], [0], [1], [0, 0, 1, 1], [], []>} : vector<16x32xf32>, vector<32x32xf32>, vector<16x32xf32> -> vector<16x32xf32>
    %c0_3 = arith.constant 0 : index
    %c0_4 = arith.constant 0 : index
    %3 = vector.load %arg9[%c0_3, %c0_4] : memref<32x16xf32, #tpu.memory_space<vmem>>, vector<32x16xf32>
    %cst_5 = arith.constant dense<0.000000e+00> : vector<16x16xf32>
    %4 = tpu.matmul %0, %3, %cst_5 {dimension_numbers = #tpu.dot_dimension_numbers<[1], [0], [0], [1], [0, 0, 1, 1], [], []>} : vector<16x32xf32>, vector<32x16xf32>, vector<16x16xf32> -> vector<16x16xf32>
    %c0_6 = arith.constant 0 : index
    %c0_7 = arith.constant 0 : index
    %5 = vector.load %arg10[%c0_6, %c0_7] : memref<32x16xf32, #tpu.memory_space<vmem>>, vector<32x16xf32>
    %cst_8 = arith.constant dense<0.000000e+00> : vector<16x16xf32>
    %6 = tpu.matmul %0, %5, %cst_8 {dimension_numbers = #tpu.dot_dimension_numbers<[1], [0], [0], [1], [0, 0, 1, 1], [], []>} : vector<16x32xf32>, vector<32x16xf32>, vector<16x16xf32> -> vector<16x16xf32>
    %c0_9 = arith.constant 0 : index
    %c0_10 = arith.constant 0 : index
    %7 = vector.load %arg12[%c0_9, %c0_10] : memref<1x32xf32, #tpu.memory_space<vmem>>, vector<1x32xf32>
    %8 = arith.mulf %2, %2 : vector<16x32xf32>
    %cst_11 = arith.constant dense<0.000000e+00> : vector<16xf32>
    %9 = vector.multi_reduction <add>, %8, %cst_11 [1] : vector<16x32xf32> to vector<16xf32>
    %10 = vector.shape_cast %9 : vector<16xf32> to vector<16x1xf32>
    %cst_12 = arith.constant 3.200000e+01 : f32
    %11 = vector.broadcast %cst_12 : f32 to vector<16x1xf32>
    %12 = arith.divf %10, %11 : vector<16x1xf32>
    %cst_13 = arith.constant 9.99999997E-7 : f32
    %13 = vector.broadcast %cst_13 : f32 to vector<16x1xf32>
    %14 = arith.addf %12, %13 : vector<16x1xf32>
    %15 = math.rsqrt %14 : vector<16x1xf32>
    %16 = vector.broadcast %15 : vector<16x1xf32> to vector<16x32xf32>
    %17 = arith.mulf %2, %16 : vector<16x32xf32>
    %18 = vector.broadcast %7 : vector<1x32xf32> to vector<16x32xf32>
    %19 = arith.mulf %17, %18 : vector<16x32xf32>
    %c0_14 = arith.constant 0 : index
    %c0_15 = arith.constant 0 : index
    %20 = vector.load %arg13[%c0_14, %c0_15] : memref<1x16xf32, #tpu.memory_space<vmem>>, vector<1x16xf32>
    %21 = arith.mulf %4, %4 : vector<16x16xf32>
    %cst_16 = arith.constant dense<0.000000e+00> : vector<16xf32>
    %22 = vector.multi_reduction <add>, %21, %cst_16 [1] : vector<16x16xf32> to vector<16xf32>
    %23 = vector.shape_cast %22 : vector<16xf32> to vector<16x1xf32>
    %cst_17 = arith.constant 1.600000e+01 : f32
    %24 = vector.broadcast %cst_17 : f32 to vector<16x1xf32>
    %25 = arith.divf %23, %24 : vector<16x1xf32>
    %cst_18 = arith.constant 9.99999997E-7 : f32
    %26 = vector.broadcast %cst_18 : f32 to vector<16x1xf32>
    %27 = arith.addf %25, %26 : vector<16x1xf32>
    %28 = math.rsqrt %27 : vector<16x1xf32>
    %29 = vector.broadcast %28 : vector<16x1xf32> to vector<16x16xf32>
    %30 = arith.mulf %4, %29 : vector<16x16xf32>
    %31 = vector.broadcast %20 : vector<1x16xf32> to vector<16x16xf32>
    %32 = arith.mulf %30, %31 : vector<16x16xf32>
    %c0_19 = arith.constant 0 : index
    %c0_20 = arith.constant 0 : index
    %33 = vector.load %arg2[%c0_19, %c0_20] : memref<16x32xf32, #tpu.memory_space<vmem>>, vector<16x32xf32>
    %34 = arith.mulf %19, %33 : vector<16x32xf32>
    %c0_21 = arith.constant 0 : index
    %c0_22 = arith.constant 0 : index
    %35 = vector.load %arg4[%c0_21, %c0_22] : memref<32x32xf32, #tpu.memory_space<vmem>>, vector<32x32xf32>
    %cst_23 = arith.constant dense<0.000000e+00> : vector<16x32xf32>
    %36 = tpu.matmul %19, %35, %cst_23 {dimension_numbers = #tpu.dot_dimension_numbers<[1], [0], [0], [1], [0, 0, 1, 1], [], []>} : vector<16x32xf32>, vector<32x32xf32>, vector<16x32xf32> -> vector<16x32xf32>
    %c0_24 = arith.constant 0 : index
    %c0_25 = arith.constant 0 : index
    %37 = vector.load %arg3[%c0_24, %c0_25] : memref<16x32xf32, #tpu.memory_space<vmem>>, vector<16x32xf32>
    %38 = arith.mulf %36, %37 : vector<16x32xf32>
    %39 = arith.addf %34, %38 : vector<16x32xf32>
    %c0_26 = arith.constant 0 : index
    %c0_27 = arith.constant 0 : index
    %40 = vector.load %arg5[%c0_26, %c0_27] : memref<16x16xf32, #tpu.memory_space<vmem>>, vector<16x16xf32>
    %41 = arith.mulf %32, %40 : vector<16x16xf32>
    %c0_28 = arith.constant 0 : index
    %c0_29 = arith.constant 0 : index
    %42 = vector.load %arg7[%c0_28, %c0_29] : memref<16x16xf32, #tpu.memory_space<vmem>>, vector<16x16xf32>
    %cst_30 = arith.constant dense<0.000000e+00> : vector<16x16xf32>
    %43 = tpu.matmul %32, %42, %cst_30 {dimension_numbers = #tpu.dot_dimension_numbers<[1], [0], [0], [1], [0, 0, 1, 1], [], []>} : vector<16x16xf32>, vector<16x16xf32>, vector<16x16xf32> -> vector<16x16xf32>
    %c0_31 = arith.constant 0 : index
    %c0_32 = arith.constant 0 : index
    %44 = vector.load %arg6[%c0_31, %c0_32] : memref<16x16xf32, #tpu.memory_space<vmem>>, vector<16x16xf32>
    %45 = arith.mulf %43, %44 : vector<16x16xf32>
    %46 = arith.addf %41, %45 : vector<16x16xf32>
    %cst_33 = arith.constant 0.000000e+00 : f32
    %47 = vector.broadcast %cst_33 : f32 to vector<8x32xf32>
    %48 = vector.extract_strided_slice %46 {offsets = [0, 0], sizes = [8, 8], strides = [1, 1]} : vector<16x16xf32> to vector<8x8xf32>
    %49 = vector.extract_strided_slice %6 {offsets = [0, 0], sizes = [8, 8], strides = [1, 1]} : vector<16x16xf32> to vector<8x8xf32>
    %50 = vector.extract_strided_slice %39 {offsets = [0, 0], sizes = [8, 8], strides = [1, 1]} : vector<16x32xf32> to vector<8x8xf32>
    %51 = vector.extract_strided_slice %39 {offsets = [0, 8], sizes = [8, 8], strides = [1, 1]} : vector<16x32xf32> to vector<8x8xf32>
    %52 = tpu.concatenate %50, %51 in 0 : vector<8x8xf32>, vector<8x8xf32> -> vector<16x8xf32>
    %cst_34 = arith.constant dense<0.000000e+00> : vector<16x8xf32>
    %53 = tpu.matmul %52, %48, %cst_34 {dimension_numbers = #tpu.dot_dimension_numbers<[1], [1], [0], [0], [0, 0, 1, 0], [], []>} : vector<16x8xf32>, vector<8x8xf32>, vector<16x8xf32> -> vector<16x8xf32>
    %cst_35 = arith.constant 0.353553385 : f32
    %54 = vector.broadcast %cst_35 : f32 to vector<16x8xf32>
    %55 = arith.mulf %53, %54 : vector<16x8xf32>
    %cst_36 = arith.constant dense<0xFF800000> : vector<16xf32>
    %56 = vector.multi_reduction <maximumf>, %55, %cst_36 [1] : vector<16x8xf32> to vector<16xf32>
    %57 = vector.shape_cast %56 : vector<16xf32> to vector<16x1xf32>
    %58 = vector.broadcast %57 : vector<16x1xf32> to vector<16x8xf32>
    %59 = arith.subf %55, %58 : vector<16x8xf32>
    %60 = math.exp %59 : vector<16x8xf32>
    %cst_37 = arith.constant dense<0.000000e+00> : vector<16xf32>
    %61 = vector.multi_reduction <add>, %60, %cst_37 [1] : vector<16x8xf32> to vector<16xf32>
    %62 = vector.shape_cast %61 : vector<16xf32> to vector<16x1xf32>
    %63 = tpu.reciprocal %62 : vector<16x1xf32> -> vector<16x1xf32>
    %64 = vector.broadcast %63 : vector<16x1xf32> to vector<16x8xf32>
    %65 = arith.mulf %60, %64 : vector<16x8xf32>
    %cst_38 = arith.constant dense<0.000000e+00> : vector<16x8xf32>
    %66 = tpu.matmul %65, %49, %cst_38 {dimension_numbers = #tpu.dot_dimension_numbers<[1], [0], [0], [1], [0, 0, 1, 1], [], []>} : vector<16x8xf32>, vector<8x8xf32>, vector<16x8xf32> -> vector<16x8xf32>
    %67 = vector.extract_strided_slice %66 {offsets = [0, 0], sizes = [8, 8], strides = [1, 1]} : vector<16x8xf32> to vector<8x8xf32>
    %c0_39 = arith.constant 0 : index
    %c0_40 = arith.constant 0 : index
    %68 = vector.load %arg11[%c0_39, %c0_40] : memref<32x32xf32, #tpu.memory_space<vmem>>, vector<8x32xf32>
    %cst_41 = arith.constant dense<0.000000e+00> : vector<8x32xf32>
    %69 = tpu.matmul %67, %68, %cst_41 {dimension_numbers = #tpu.dot_dimension_numbers<[1], [0], [0], [1], [0, 0, 1, 1], [], []>} : vector<8x8xf32>, vector<8x32xf32>, vector<8x32xf32> -> vector<8x32xf32>
    %70 = arith.addf %47, %69 : vector<8x32xf32>
    %71 = vector.extract_strided_slice %66 {offsets = [8, 0], sizes = [8, 8], strides = [1, 1]} : vector<16x8xf32> to vector<8x8xf32>
    %c8 = arith.constant 8 : index
    %c0_42 = arith.constant 0 : index
    %72 = vector.load %arg11[%c8, %c0_42] : memref<32x32xf32, #tpu.memory_space<vmem>>, vector<8x32xf32>
    %cst_43 = arith.constant dense<0.000000e+00> : vector<8x32xf32>
    %73 = tpu.matmul %71, %72, %cst_43 {dimension_numbers = #tpu.dot_dimension_numbers<[1], [0], [0], [1], [0, 0, 1, 1], [], []>} : vector<8x8xf32>, vector<8x32xf32>, vector<8x32xf32> -> vector<8x32xf32>
    %74 = arith.addf %70, %73 : vector<8x32xf32>
    %75 = vector.extract_strided_slice %46 {offsets = [0, 8], sizes = [8, 8], strides = [1, 1]} : vector<16x16xf32> to vector<8x8xf32>
    %76 = vector.extract_strided_slice %6 {offsets = [0, 8], sizes = [8, 8], strides = [1, 1]} : vector<16x16xf32> to vector<8x8xf32>
    %77 = vector.extract_strided_slice %39 {offsets = [0, 16], sizes = [8, 8], strides = [1, 1]} : vector<16x32xf32> to vector<8x8xf32>
    %78 = vector.extract_strided_slice %39 {offsets = [0, 24], sizes = [8, 8], strides = [1, 1]} : vector<16x32xf32> to vector<8x8xf32>
    %79 = tpu.concatenate %77, %78 in 0 : vector<8x8xf32>, vector<8x8xf32> -> vector<16x8xf32>
    %cst_44 = arith.constant dense<0.000000e+00> : vector<16x8xf32>
    %80 = tpu.matmul %79, %75, %cst_44 {dimension_numbers = #tpu.dot_dimension_numbers<[1], [1], [0], [0], [0, 0, 1, 0], [], []>} : vector<16x8xf32>, vector<8x8xf32>, vector<16x8xf32> -> vector<16x8xf32>
    %cst_45 = arith.constant 0.353553385 : f32
    %81 = vector.broadcast %cst_45 : f32 to vector<16x8xf32>
    %82 = arith.mulf %80, %81 : vector<16x8xf32>
    %cst_46 = arith.constant dense<0xFF800000> : vector<16xf32>
    %83 = vector.multi_reduction <maximumf>, %82, %cst_46 [1] : vector<16x8xf32> to vector<16xf32>
    %84 = vector.shape_cast %83 : vector<16xf32> to vector<16x1xf32>
    %85 = vector.broadcast %84 : vector<16x1xf32> to vector<16x8xf32>
    %86 = arith.subf %82, %85 : vector<16x8xf32>
    %87 = math.exp %86 : vector<16x8xf32>
    %cst_47 = arith.constant dense<0.000000e+00> : vector<16xf32>
    %88 = vector.multi_reduction <add>, %87, %cst_47 [1] : vector<16x8xf32> to vector<16xf32>
    %89 = vector.shape_cast %88 : vector<16xf32> to vector<16x1xf32>
    %90 = tpu.reciprocal %89 : vector<16x1xf32> -> vector<16x1xf32>
    %91 = vector.broadcast %90 : vector<16x1xf32> to vector<16x8xf32>
    %92 = arith.mulf %87, %91 : vector<16x8xf32>
    %cst_48 = arith.constant dense<0.000000e+00> : vector<16x8xf32>
    %93 = tpu.matmul %92, %76, %cst_48 {dimension_numbers = #tpu.dot_dimension_numbers<[1], [0], [0], [1], [0, 0, 1, 1], [], []>} : vector<16x8xf32>, vector<8x8xf32>, vector<16x8xf32> -> vector<16x8xf32>
    %94 = vector.extract_strided_slice %93 {offsets = [0, 0], sizes = [8, 8], strides = [1, 1]} : vector<16x8xf32> to vector<8x8xf32>
    %c16 = arith.constant 16 : index
    %c0_49 = arith.constant 0 : index
    %95 = vector.load %arg11[%c16, %c0_49] : memref<32x32xf32, #tpu.memory_space<vmem>>, vector<8x32xf32>
    %cst_50 = arith.constant dense<0.000000e+00> : vector<8x32xf32>
    %96 = tpu.matmul %94, %95, %cst_50 {dimension_numbers = #tpu.dot_dimension_numbers<[1], [0], [0], [1], [0, 0, 1, 1], [], []>} : vector<8x8xf32>, vector<8x32xf32>, vector<8x32xf32> -> vector<8x32xf32>
    %97 = arith.addf %74, %96 : vector<8x32xf32>
    %98 = vector.extract_strided_slice %93 {offsets = [8, 0], sizes = [8, 8], strides = [1, 1]} : vector<16x8xf32> to vector<8x8xf32>
    %c24 = arith.constant 24 : index
    %c0_51 = arith.constant 0 : index
    %99 = vector.load %arg11[%c24, %c0_51] : memref<32x32xf32, #tpu.memory_space<vmem>>, vector<8x32xf32>
    %cst_52 = arith.constant dense<0.000000e+00> : vector<8x32xf32>
    %100 = tpu.matmul %98, %99, %cst_52 {dimension_numbers = #tpu.dot_dimension_numbers<[1], [0], [0], [1], [0, 0, 1, 1], [], []>} : vector<8x8xf32>, vector<8x32xf32>, vector<8x32xf32> -> vector<8x32xf32>
    %101 = arith.addf %97, %100 : vector<8x32xf32>
    %c0_53 = arith.constant 0 : index
    %c0_54 = arith.constant 0 : index
    %102 = vector.load %arg14[%c0_53, %c0_54] : memref<16x32xf32, #tpu.memory_space<vmem>>, vector<8x32xf32>
    tpu.vector_store %arg14[%c0_53, %c0_54], %101 {strides = array<i32>} : memref<16x32xf32, #tpu.memory_space<vmem>>, vector<8x32xf32>,
    %cst_55 = arith.constant 0.000000e+00 : f32
    %103 = vector.broadcast %cst_55 : f32 to vector<8x32xf32>
    %104 = vector.extract_strided_slice %46 {offsets = [8, 0], sizes = [8, 8], strides = [1, 1]} : vector<16x16xf32> to vector<8x8xf32>
    %105 = vector.extract_strided_slice %6 {offsets = [8, 0], sizes = [8, 8], strides = [1, 1]} : vector<16x16xf32> to vector<8x8xf32>
    %106 = vector.extract_strided_slice %39 {offsets = [8, 0], sizes = [8, 8], strides = [1, 1]} : vector<16x32xf32> to vector<8x8xf32>
    %107 = vector.extract_strided_slice %39 {offsets = [8, 8], sizes = [8, 8], strides = [1, 1]} : vector<16x32xf32> to vector<8x8xf32>
    %108 = tpu.concatenate %106, %107 in 0 : vector<8x8xf32>, vector<8x8xf32> -> vector<16x8xf32>
    %cst_56 = arith.constant dense<0.000000e+00> : vector<16x8xf32>
    %109 = tpu.matmul %108, %104, %cst_56 {dimension_numbers = #tpu.dot_dimension_numbers<[1], [1], [0], [0], [0, 0, 1, 0], [], []>} : vector<16x8xf32>, vector<8x8xf32>, vector<16x8xf32> -> vector<16x8xf32>
    %cst_57 = arith.constant 0.353553385 : f32
    %110 = vector.broadcast %cst_57 : f32 to vector<16x8xf32>
    %111 = arith.mulf %109, %110 : vector<16x8xf32>
    %cst_58 = arith.constant dense<0xFF800000> : vector<16xf32>
    %112 = vector.multi_reduction <maximumf>, %111, %cst_58 [1] : vector<16x8xf32> to vector<16xf32>
    %113 = vector.shape_cast %112 : vector<16xf32> to vector<16x1xf32>
    %114 = vector.broadcast %113 : vector<16x1xf32> to vector<16x8xf32>
    %115 = arith.subf %111, %114 : vector<16x8xf32>
    %116 = math.exp %115 : vector<16x8xf32>
    %cst_59 = arith.constant dense<0.000000e+00> : vector<16xf32>
    %117 = vector.multi_reduction <add>, %116, %cst_59 [1] : vector<16x8xf32> to vector<16xf32>
    %118 = vector.shape_cast %117 : vector<16xf32> to vector<16x1xf32>
    %119 = tpu.reciprocal %118 : vector<16x1xf32> -> vector<16x1xf32>
    %120 = vector.broadcast %119 : vector<16x1xf32> to vector<16x8xf32>
    %121 = arith.mulf %116, %120 : vector<16x8xf32>
    %cst_60 = arith.constant dense<0.000000e+00> : vector<16x8xf32>
    %122 = tpu.matmul %121, %105, %cst_60 {dimension_numbers = #tpu.dot_dimension_numbers<[1], [0], [0], [1], [0, 0, 1, 1], [], []>} : vector<16x8xf32>, vector<8x8xf32>, vector<16x8xf32> -> vector<16x8xf32>
    %123 = vector.extract_strided_slice %122 {offsets = [0, 0], sizes = [8, 8], strides = [1, 1]} : vector<16x8xf32> to vector<8x8xf32>
    %c0_61 = arith.constant 0 : index
    %c0_62 = arith.constant 0 : index
    %124 = vector.load %arg11[%c0_61, %c0_62] : memref<32x32xf32, #tpu.memory_space<vmem>>, vector<8x32xf32>
    %cst_63 = arith.constant dense<0.000000e+00> : vector<8x32xf32>
    %125 = tpu.matmul %123, %124, %cst_63 {dimension_numbers = #tpu.dot_dimension_numbers<[1], [0], [0], [1], [0, 0, 1, 1], [], []>} : vector<8x8xf32>, vector<8x32xf32>, vector<8x32xf32> -> vector<8x32xf32>
    %126 = arith.addf %103, %125 : vector<8x32xf32>
    %127 = vector.extract_strided_slice %122 {offsets = [8, 0], sizes = [8, 8], strides = [1, 1]} : vector<16x8xf32> to vector<8x8xf32>
    %c8_64 = arith.constant 8 : index
    %c0_65 = arith.constant 0 : index
    %128 = vector.load %arg11[%c8_64, %c0_65] : memref<32x32xf32, #tpu.memory_space<vmem>>, vector<8x32xf32>
    %cst_66 = arith.constant dense<0.000000e+00> : vector<8x32xf32>
    %129 = tpu.matmul %127, %128, %cst_66 {dimension_numbers = #tpu.dot_dimension_numbers<[1], [0], [0], [1], [0, 0, 1, 1], [], []>} : vector<8x8xf32>, vector<8x32xf32>, vector<8x32xf32> -> vector<8x32xf32>
    %130 = arith.addf %126, %129 : vector<8x32xf32>
    %131 = vector.extract_strided_slice %46 {offsets = [8, 8], sizes = [8, 8], strides = [1, 1]} : vector<16x16xf32> to vector<8x8xf32>
    %132 = vector.extract_strided_slice %6 {offsets = [8, 8], sizes = [8, 8], strides = [1, 1]} : vector<16x16xf32> to vector<8x8xf32>
    %133 = vector.extract_strided_slice %39 {offsets = [8, 16], sizes = [8, 8], strides = [1, 1]} : vector<16x32xf32> to vector<8x8xf32>
    %134 = vector.extract_strided_slice %39 {offsets = [8, 24], sizes = [8, 8], strides = [1, 1]} : vector<16x32xf32> to vector<8x8xf32>
    %135 = tpu.concatenate %133, %134 in 0 : vector<8x8xf32>, vector<8x8xf32> -> vector<16x8xf32>
    %cst_67 = arith.constant dense<0.000000e+00> : vector<16x8xf32>
    %136 = tpu.matmul %135, %131, %cst_67 {dimension_numbers = #tpu.dot_dimension_numbers<[1], [1], [0], [0], [0, 0, 1, 0], [], []>} : vector<16x8xf32>, vector<8x8xf32>, vector<16x8xf32> -> vector<16x8xf32>
    %cst_68 = arith.constant 0.353553385 : f32
    %137 = vector.broadcast %cst_68 : f32 to vector<16x8xf32>
    %138 = arith.mulf %136, %137 : vector<16x8xf32>
    %cst_69 = arith.constant dense<0xFF800000> : vector<16xf32>
    %139 = vector.multi_reduction <maximumf>, %138, %cst_69 [1] : vector<16x8xf32> to vector<16xf32>
    %140 = vector.shape_cast %139 : vector<16xf32> to vector<16x1xf32>
    %141 = vector.broadcast %140 : vector<16x1xf32> to vector<16x8xf32>
    %142 = arith.subf %138, %141 : vector<16x8xf32>
    %143 = math.exp %142 : vector<16x8xf32>
    %cst_70 = arith.constant dense<0.000000e+00> : vector<16xf32>
    %144 = vector.multi_reduction <add>, %143, %cst_70 [1] : vector<16x8xf32> to vector<16xf32>
    %145 = vector.shape_cast %144 : vector<16xf32> to vector<16x1xf32>
    %146 = tpu.reciprocal %145 : vector<16x1xf32> -> vector<16x1xf32>
    %147 = vector.broadcast %146 : vector<16x1xf32> to vector<16x8xf32>
    %148 = arith.mulf %143, %147 : vector<16x8xf32>
    %cst_71 = arith.constant dense<0.000000e+00> : vector<16x8xf32>
    %149 = tpu.matmul %148, %132, %cst_71 {dimension_numbers = #tpu.dot_dimension_numbers<[1], [0], [0], [1], [0, 0, 1, 1], [], []>} : vector<16x8xf32>, vector<8x8xf32>, vector<16x8xf32> -> vector<16x8xf32>
    %150 = vector.extract_strided_slice %149 {offsets = [0, 0], sizes = [8, 8], strides = [1, 1]} : vector<16x8xf32> to vector<8x8xf32>
    %c16_72 = arith.constant 16 : index
    %c0_73 = arith.constant 0 : index
    %151 = vector.load %arg11[%c16_72, %c0_73] : memref<32x32xf32, #tpu.memory_space<vmem>>, vector<8x32xf32>
    %cst_74 = arith.constant dense<0.000000e+00> : vector<8x32xf32>
    %152 = tpu.matmul %150, %151, %cst_74 {dimension_numbers = #tpu.dot_dimension_numbers<[1], [0], [0], [1], [0, 0, 1, 1], [], []>} : vector<8x8xf32>, vector<8x32xf32>, vector<8x32xf32> -> vector<8x32xf32>
    %153 = arith.addf %130, %152 : vector<8x32xf32>
    %154 = vector.extract_strided_slice %149 {offsets = [8, 0], sizes = [8, 8], strides = [1, 1]} : vector<16x8xf32> to vector<8x8xf32>
    %c24_75 = arith.constant 24 : index
    %c0_76 = arith.constant 0 : index
    %155 = vector.load %arg11[%c24_75, %c0_76] : memref<32x32xf32, #tpu.memory_space<vmem>>, vector<8x32xf32>
    %cst_77 = arith.constant dense<0.000000e+00> : vector<8x32xf32>
    %156 = tpu.matmul %154, %155, %cst_77 {dimension_numbers = #tpu.dot_dimension_numbers<[1], [0], [0], [1], [0, 0, 1, 1], [], []>} : vector<8x8xf32>, vector<8x32xf32>, vector<8x32xf32> -> vector<8x32xf32>
    %157 = arith.addf %153, %156 : vector<8x32xf32>
    %c8_78 = arith.constant 8 : index
    %c0_79 = arith.constant 0 : index
    %158 = vector.load %arg14[%c8_78, %c0_79] : memref<16x32xf32, #tpu.memory_space<vmem>>, vector<8x32xf32>
    tpu.vector_store %arg14[%c8_78, %c0_79], %157 {strides = array<i32>} : memref<16x32xf32, #tpu.memory_space<vmem>>, vector<8x32xf32>,
    return
  }
  func.func @transform_0(%arg0: i32) -> (i32, i32) {
    %c0_i32 = arith.constant 0 : i32
    %c0_i32_0 = arith.constant 0 : i32
    return %arg0, %c0_i32 : i32, i32
  }
  func.func @transform_1(%arg0: i32) -> (i32, i32) {
    %c0_i32 = arith.constant 0 : i32
    %c0_i32_0 = arith.constant 0 : i32
    %c0_i32_1 = arith.constant 0 : i32
    return %c0_i32, %c0_i32_0 : i32, i32
  }
  func.func @transform_2(%arg0: i32) -> (i32, i32) {
    %c0_i32 = arith.constant 0 : i32
    %c0_i32_0 = arith.constant 0 : i32
    %c0_i32_1 = arith.constant 0 : i32
    return %c0_i32, %c0_i32_0 : i32, i32
  }
  func.func @transform_3(%arg0: i32) -> (i32, i32) {
    %c0_i32 = arith.constant 0 : i32
    %c0_i32_0 = arith.constant 0 : i32
    %c0_i32_1 = arith.constant 0 : i32
    return %c0_i32, %c0_i32_0 : i32, i32
  }
  func.func @transform_4(%arg0: i32) -> (i32, i32) {
    %c0_i32 = arith.constant 0 : i32
    %c0_i32_0 = arith.constant 0 : i32
    %c0_i32_1 = arith.constant 0 : i32
    return %c0_i32, %c0_i32_0 : i32, i32
  }
  func.func @transform_5(%arg0: i32) -> (i32, i32) {
    %c0_i32 = arith.constant 0 : i32
    %c0_i32_0 = arith.constant 0 : i32
    %c0_i32_1 = arith.constant 0 : i32
    return %c0_i32, %c0_i32_0 : i32, i32
  }
  func.func @transform_6(%arg0: i32) -> (i32, i32) {
    %c0_i32 = arith.constant 0 : i32
    %c0_i32_0 = arith.constant 0 : i32
    %c0_i32_1 = arith.constant 0 : i32
    return %c0_i32, %c0_i32_0 : i32, i32
  }
  func.func @transform_7(%arg0: i32) -> (i32, i32) {
    %c0_i32 = arith.constant 0 : i32
    %c0_i32_0 = arith.constant 0 : i32
    %c0_i32_1 = arith.constant 0 : i32
    return %c0_i32, %c0_i32_0 : i32, i32
  }
  func.func @transform_8(%arg0: i32) -> (i32, i32) {
    %c0_i32 = arith.constant 0 : i32
    %c0_i32_0 = arith.constant 0 : i32
    %c0_i32_1 = arith.constant 0 : i32
    return %c0_i32, %c0_i32_0 : i32, i32
  }
  func.func @transform_9(%arg0: i32) -> (i32, i32) {
    %c0_i32 = arith.constant 0 : i32
    %c0_i32_0 = arith.constant 0 : i32
    %c0_i32_1 = arith.constant 0 : i32
    return %c0_i32, %c0_i32_0 : i32, i32
  }
  func.func @transform_10(%arg0: i32) -> (i32, i32) {
    %c0_i32 = arith.constant 0 : i32
    %c0_i32_0 = arith.constant 0 : i32
    %c0_i32_1 = arith.constant 0 : i32
    return %c0_i32, %c0_i32_0 : i32, i32
  }
  func.func @transform_11(%arg0: i32) -> (i32, i32) {
    %c0_i32 = arith.constant 0 : i32
    %c0_i32_0 = arith.constant 0 : i32
    %c0_i32_1 = arith.constant 0 : i32
    return %c0_i32, %c0_i32_0 : i32, i32
  }
  func.func @transform_12(%arg0: i32) -> (i32, i32) {
    %c0_i32 = arith.constant 0 : i32
    %c0_i32_0 = arith.constant 0 : i32
    %c0_i32_1 = arith.constant 0 : i32
    return %c0_i32, %c0_i32_0 : i32, i32
  }
  func.func @transform_13(%arg0: i32) -> (i32, i32) {
    %c0_i32 = arith.constant 0 : i32
    %c0_i32_0 = arith.constant 0 : i32
    return %arg0, %c0_i32 : i32, i32
  }
}

</mosaic_0001>

<llo_original>
// kernel: tpu_custom_call.1
$region0: #{tpu_custom_call.1}
  #allocation0 [shape = 'u32[]', space=smem, size = 0x4, offset = 0x4, fixed_abs, tag = 'smem constant byte address 0x4 - core index']
  #allocation1 [shape = 'u32[144,128]{1,0:T(1,128)}', space=vmem, size = 0x12000, scoped, tag = 'internal scratch']
  %s0 = inlined_call_operand.hbm [shape: f32[16,32], index: 0, kind: input, shape index: {}]
  %s1 = inlined_call_operand.hbm [shape: f32[16,32], index: 1, kind: input, shape index: {}]
  %s2 = inlined_call_operand.hbm [shape: f32[16,32], index: 2, kind: input, shape index: {}]
  %s3 = inlined_call_operand.vmem [shape: f32[32,32], index: 3, kind: input, shape index: {}]
  %s4 = inlined_call_operand.hbm [shape: f32[16,16], index: 4, kind: input, shape index: {}]
  %s5 = inlined_call_operand.hbm [shape: f32[16,16], index: 5, kind: input, shape index: {}]
  %s6 = inlined_call_operand.hbm [shape: f32[16,16], index: 6, kind: input, shape index: {}]
  %s7 = inlined_call_operand.vmem [shape: f32[32,32], index: 7, kind: input, shape index: {}]
  %s8 = inlined_call_operand.vmem [shape: f32[32,16], index: 8, kind: input, shape index: {}]
  %s9 = inlined_call_operand.vmem [shape: f32[32,16], index: 9, kind: input, shape index: {}]
  %s10 = inlined_call_operand.vmem [shape: f32[32,32], index: 10, kind: input, shape index: {}]
  %s11 = inlined_call_operand.vmem [shape: f32[1,32], index: 11, kind: input, shape index: {}]
  %s12 = inlined_call_operand.vmem [shape: f32[1,16], index: 12, kind: input, shape index: {}]
  %s13 = inlined_call_operand.hbm [shape: f32[16,32], index: 13, kind: output, shape index: {}]
  %s14 = sld [smem:[#allocation0]]
  $region86: #{tpu_custom_call.1} parent=0
    _
  %s16 = ssub.s32 1, %s14
  %s17 = scalar_select 0, %s16, %s14
  $region1: #{tpu_custom_call.1} parent=0
    #allocation2 [shape = 'u8[8192]{0}', space=vmem, size = 0x2000, scoped, tag = 'input window, operand 0, single buffered']
    #allocation3 [shape = 's32[1]{0}', space=sflag, size = 0x4, scoped, tag = 'scoped memory for tpu_custom_call.1']
    #allocation4 [shape = 's32[1]{0}', space=sflag, size = 0x4, scoped, tag = 'scoped memory for tpu_custom_call.1']
    #allocation5 [shape = 'u8[8192]{0}', space=vmem, size = 0x2000, scoped, tag = 'input window, operand 1, single buffered']
    #allocation6 [shape = 's32[1]{0}', space=sflag, size = 0x4, scoped, tag = 'scoped memory for tpu_custom_call.1']
    #allocation7 [shape = 'u8[8192]{0}', space=vmem, size = 0x2000, scoped, tag = 'input window, operand 2, single buffered']
    #allocation8 [shape = 'u8[8192]{0}', space=vmem, size = 0x2000, scoped, tag = 'input window, operand 4, single buffered']
    #allocation9 [shape = 's32[1]{0}', space=sflag, size = 0x4, scoped, tag = 'scoped memory for tpu_custom_call.1']
    #allocation10 [shape = 'u8[8192]{0}', space=vmem, size = 0x2000, scoped, tag = 'input window, operand 5, single buffered']
    #allocation11 [shape = 'u8[8192]{0}', space=vmem, size = 0x2000, scoped, tag = 'input window, operand 6, single buffered']
    #allocation12 [shape = 's32[1]{0}', space=sflag, size = 0x4, scoped, tag = 'scoped memory for tpu_custom_call.1']
    #allocation13 [shape = 'u8[8192]{0}', space=vmem, size = 0x2000, scoped, tag = 'output window, operand 0, single buffered']
    %18 = vsyncpa [#allocation3], 0
    %19 = vsyncpa [#allocation6], 0
    %20 = vsyncpa [#allocation9], 0
    %21 = vsyncpa [#allocation12], 0
    %22 = vsyncpa [#allocation4], 0
    // Predicated region
    $region2: #{tpu_custom_call.1} parent=1 // pred_check
      _
    $region3: #{tpu_custom_call.1} parent=1 // pred_check_branch
      %24 = sbr.rel (0) target = $region5
    $region4: #{tpu_custom_call.1} parent=1 // pred_region
      %s26 = ssub.s32 256, 256
      %27 = vsyncadd [#allocation3], %s26
      %s28 = sshll.u32 [#allocation2], 4
      %s29 = int_to_ptr.vmem [resolvable:$true] %s28
      %34 = dma.hbm_to_vmem [thread:$0]  %s0, 256, %s29, [#allocation3], 128, 128, 8
    $region5: #{tpu_custom_call.1} parent=1 // pred_fallthru
      _
    // Predicated region
    $region6: #{tpu_custom_call.1} parent=1 // pred_check
      _
    $region7: #{tpu_custom_call.1} parent=1 // pred_check_branch
      %36 = sbr.rel (0) target = $region9
    $region8: #{tpu_custom_call.1} parent=1 // pred_region
      %s38 = ssub.s32 256, 256
      %39 = vsyncadd [#allocation6], %s38
      %s40 = sshll.u32 [#allocation5], 4
      %s41 = int_to_ptr.vmem [resolvable:$true] %s40
      %46 = dma.hbm_to_vmem [thread:$0]  %s1, 256, %s41, [#allocation6], 128, 128, 8
    $region9: #{tpu_custom_call.1} parent=1 // pred_fallthru
      _
    // Predicated region
    $region10: #{tpu_custom_call.1} parent=1 // pred_check
      _
    $region11: #{tpu_custom_call.1} parent=1 // pred_check_branch
      %48 = sbr.rel (0) target = $region13
    $region12: #{tpu_custom_call.1} parent=1 // pred_region
      %s50 = ssub.s32 256, 256
      %51 = vsyncadd [#allocation6], %s50
      %s52 = sshll.u32 [#allocation7], 4
      %s53 = int_to_ptr.vmem [resolvable:$true] %s52
      %58 = dma.hbm_to_vmem [thread:$0]  %s2, 256, %s53, [#allocation6], 128, 128, 8
    $region13: #{tpu_custom_call.1} parent=1 // pred_fallthru
      _
    // Predicated region
    $region14: #{tpu_custom_call.1} parent=1 // pred_check
      _
    $region15: #{tpu_custom_call.1} parent=1 // pred_check_branch
      %60 = sbr.rel (0) target = $region17
    $region16: #{tpu_custom_call.1} parent=1 // pred_region
      _
    $region17: #{tpu_custom_call.1} parent=1 // pred_fallthru
      _
    // Predicated region
    $region18: #{tpu_custom_call.1} parent=1 // pred_check
      _
    $region19: #{tpu_custom_call.1} parent=1 // pred_check_branch
      %62 = sbr.rel (0) target = $region21
    $region20: #{tpu_custom_call.1} parent=1 // pred_region
      %s64 = ssub.s32 256, 256
      %65 = vsyncadd [#allocation9], %s64
      %s66 = sshll.u32 [#allocation8], 4
      %s67 = int_to_ptr.vmem [resolvable:$true] %s66
      %72 = dma.hbm_to_vmem [thread:$0]  %s4, 256, %s67, [#allocation9], 128, 128, 8
    $region21: #{tpu_custom_call.1} parent=1 // pred_fallthru
      _
    // Predicated region
    $region22: #{tpu_custom_call.1} parent=1 // pred_check
      _
    $region23: #{tpu_custom_call.1} parent=1 // pred_check_branch
      %74 = sbr.rel (0) target = $region25
    $region24: #{tpu_custom_call.1} parent=1 // pred_region
      %s76 = ssub.s32 256, 256
      %77 = vsyncadd [#allocation9], %s76
      %s78 = sshll.u32 [#allocation10], 4
      %s79 = int_to_ptr.vmem [resolvable:$true] %s78
      %84 = dma.hbm_to_vmem [thread:$0]  %s5, 256, %s79, [#allocation9], 128, 128, 8
    $region25: #{tpu_custom_call.1} parent=1 // pred_fallthru
      _
    // Predicated region
    $region26: #{tpu_custom_call.1} parent=1 // pred_check
      _
    $region27: #{tpu_custom_call.1} parent=1 // pred_check_branch
      %86 = sbr.rel (0) target = $region29
    $region28: #{tpu_custom_call.1} parent=1 // pred_region
      %s88 = ssub.s32 256, 256
      %89 = vsyncadd [#allocation12], %s88
      %s90 = sshll.u32 [#allocation11], 4
      %s91 = int_to_ptr.vmem [resolvable:$true] %s90
      %96 = dma.hbm_to_vmem [thread:$0]  %s6, 256, %s91, [#allocation12], 128, 128, 8
    $region29: #{tpu_custom_call.1} parent=1 // pred_fallthru
      _
    // Predicated region
    $region30: #{tpu_custom_call.1} parent=1 // pred_check
      _
    $region31: #{tpu_custom_call.1} parent=1 // pred_check_branch
      %98 = sbr.rel (0) target = $region33
    $region32: #{tpu_custom_call.1} parent=1 // pred_region
      _
    $region33: #{tpu_custom_call.1} parent=1 // pred_fallthru
      _
    // Predicated region
    $region34: #{tpu_custom_call.1} parent=1 // pred_check
      _
    $region35: #{tpu_custom_call.1} parent=1 // pred_check_branch
      %100 = sbr.rel (0) target = $region37
    $region36: #{tpu_custom_call.1} parent=1 // pred_region
      _
    $region37: #{tpu_custom_call.1} parent=1 // pred_fallthru
      _
    // Predicated region
    $region38: #{tpu_custom_call.1} parent=1 // pred_check
      _
    $region39: #{tpu_custom_call.1} parent=1 // pred_check_branch
      %102 = sbr.rel (0) target = $region41
    $region40: #{tpu_custom_call.1} parent=1 // pred_region
      _
    $region41: #{tpu_custom_call.1} parent=1 // pred_fallthru
      _
    // Predicated region
    $region42: #{tpu_custom_call.1} parent=1 // pred_check
      _
    $region43: #{tpu_custom_call.1} parent=1 // pred_check_branch
      %104 = sbr.rel (0) target = $region45
    $region44: #{tpu_custom_call.1} parent=1 // pred_region
      _
    $region45: #{tpu_custom_call.1} parent=1 // pred_fallthru
      _
    // Predicated region
    $region46: #{tpu_custom_call.1} parent=1 // pred_check
      _
    $region47: #{tpu_custom_call.1} parent=1 // pred_check_branch
      %106 = sbr.rel (0) target = $region49
    $region48: #{tpu_custom_call.1} parent=1 // pred_region
      _
    $region49: #{tpu_custom_call.1} parent=1 // pred_fallthru
      _
    // Predicated region
    $region50: #{tpu_custom_call.1} parent=1 // pred_check
      _
    $region51: #{tpu_custom_call.1} parent=1 // pred_check_branch
      %108 = sbr.rel (0) target = $region53
    $region52: #{tpu_custom_call.1} parent=1 // pred_region
      _
    $region53: #{tpu_custom_call.1} parent=1 // pred_fallthru
      _
    // Predicated region
    $region54: #{tpu_custom_call.1} parent=1 // pred_check
      _
    $region55: #{tpu_custom_call.1} parent=1 // pred_check_branch
      %110 = sbr.rel (0) target = $region57
    $region56: #{tpu_custom_call.1} parent=1 // pred_region
      %111 = dma.done [#allocation3], 256
    $region57: #{tpu_custom_call.1} parent=1 // pred_fallthru
      _
    // Predicated region
    $region58: #{tpu_custom_call.1} parent=1 // pred_check
      _
    $region59: #{tpu_custom_call.1} parent=1 // pred_check_branch
      %113 = sbr.rel (0) target = $region61
    $region60: #{tpu_custom_call.1} parent=1 // pred_region
      %114 = dma.done [#allocation6], 256
    $region61: #{tpu_custom_call.1} parent=1 // pred_fallthru
      _
    // Predicated region
    $region62: #{tpu_custom_call.1} parent=1 // pred_check
      _
    $region63: #{tpu_custom_call.1} parent=1 // pred_check_branch
      %116 = sbr.rel (0) target = $region65
    $region64: #{tpu_custom_call.1} parent=1 // pred_region
      %117 = dma.done [#allocation6], 256
    $region65: #{tpu_custom_call.1} parent=1 // pred_fallthru
      _
    // Predicated region
    $region66: #{tpu_custom_call.1} parent=1 // pred_check
      _
    $region67: #{tpu_custom_call.1} parent=1 // pred_check_branch
      %119 = sbr.rel (0) target = $region69
    $region68: #{tpu_custom_call.1} parent=1 // pred_region
      %120 = dma.done [#allocation9], 256
    $region69: #{tpu_custom_call.1} parent=1 // pred_fallthru
      _
    // Predicated region
    $region70: #{tpu_custom_call.1} parent=1 // pred_check
      _
    $region71: #{tpu_custom_call.1} parent=1 // pred_check_branch
      %122 = sbr.rel (0) target = $region73
    $region72: #{tpu_custom_call.1} parent=1 // pred_region
      %123 = dma.done [#allocation9], 256
    $region73: #{tpu_custom_call.1} parent=1 // pred_fallthru
      _
    // Predicated region
    $region74: #{tpu_custom_call.1} parent=1 // pred_check
      _
    $region75: #{tpu_custom_call.1} parent=1 // pred_check_branch
      %125 = sbr.rel (0) target = $region77
    $region76: #{tpu_custom_call.1} parent=1 // pred_region
      %126 = dma.done [#allocation12], 256
    $region77: #{tpu_custom_call.1} parent=1 // pred_fallthru
      _
    %v127 = vld [vmem:[#allocation2] sm:$0xff]
    %v128 = vld [vmem:[#allocation2 + $0x8] sm:$0xff]
    %v129 = vld [vmem:[%s7] sm:$0xff]
    %v130 = vld [vmem:[%s7 + $0x8] sm:$0xff]
    %v131 = vld [vmem:[%s7 + $0x10] sm:$0xff]
    %v132 = vld [vmem:[%s7 + $0x18] sm:$0xff]
    %vm133 = vcmask 261120
    %v135 = vsel %vm133, %v127, 0
    %v138 = vsel %vm133, %v128, 0
    %140 = vmatprep.subr.mxu0 0.0
    %141 = vmatpush1.msra.mxu0 0.0
    %142 = vmatprep.subr.mxu0 0.0
    %143 = vmatpush1.msra.mxu0 0.0
    %144 = vmatprep.subr.mxu0 0.0
    %145 = vmatpush1.msra.mxu0 0.0
    %146 = vmatprep.subr.mxu0 0.0
    %147 = vmatpush1.msra.mxu0 0.0
    %148 = vmatprep.subr.mxu0 0.0
    %149 = vmatpush1.msra.mxu0 0.0
    %150 = vmatprep.subr.mxu0 0.0
    %151 = vmatpush1.msra.mxu0 0.0
    %152 = vmatprep.subr.mxu0 0.0
    %153 = vmatpush1.msra.mxu0 0.0
    %154 = vmatprep.subr.mxu0 0.0
    %155 = vmatpush1.msra.mxu0 0.0
    %156 = vmatprep.subr.mxu0 0.0
    %157 = vmatpush1.msra.mxu0 0.0
    %158 = vmatprep.subr.mxu0 0.0
    %159 = vmatpush1.msra.mxu0 0.0
    %160 = vmatprep.subr.mxu0 0.0
    %161 = vmatpush1.msra.mxu0 0.0
    %162 = vmatprep.subr.mxu0 0.0
    %163 = vmatpush1.msra.mxu0 0.0
    %164 = vmatprep.subr.mxu0 0.0
    %165 = vmatpush1.msra.mxu0 %v132
    %166 = vmatprep.subr.mxu0 0.0
    %167 = vmatpush1.msra.mxu0 %v131
    %168 = vmatprep.subr.mxu0 0.0
    %169 = vmatpush1.msra.mxu0 %v130
    %170 = vmatprep.subr.mxu0 0.0
    %171 = vmatpush1.msra.mxu0 %v129
    %172 = vmatprep.subr.mxu0 0.0
    %173 = vmatpush2.msra.mxu0 0.0
    %174 = vmatprep.subr.mxu0 0.0
    %175 = vmatpush2.msra.mxu0 0.0
    %176 = vmatprep.subr.mxu0 0.0
    %177 = vmatpush2.msra.mxu0 0.0
    %178 = vmatprep.subr.mxu0 0.0
    %179 = vmatpush2.msra.mxu0 0.0
    %180 = vmatprep.subr.mxu0 0.0
    %181 = vmatpush2.msra.mxu0 0.0
    %182 = vmatprep.subr.mxu0 0.0
    %183 = vmatpush2.msra.mxu0 0.0
    %184 = vmatprep.subr.mxu0 0.0
    %185 = vmatpush2.msra.mxu0 0.0
    %186 = vmatprep.subr.mxu0 0.0
    %187 = vmatpush2.msra.mxu0 0.0
    %188 = vmatprep.subr.mxu0 0.0
    %189 = vmatpush2.msra.mxu0 0.0
    %190 = vmatprep.subr.mxu0 0.0
    %191 = vmatpush2.msra.mxu0 0.0
    %192 = vmatprep.subr.mxu0 0.0
    %193 = vmatpush2.msra.mxu0 0.0
    %194 = vmatprep.subr.mxu0 0.0
    %195 = vmatpush2.msra.mxu0 0.0
    %196 = vmatprep.subr.mxu0 0.0
    %197 = vmatpush2.msra.mxu0 0.0
    %198 = vmatprep.subr.mxu0 0.0
    %199 = vmatpush2.msra.mxu0 0.0
    %200 = vmatprep.subr.mxu0 0.0
    %201 = vmatpush2.msra.mxu0 0.0
    %202 = vmatprep.subr.mxu0 0.0
    %203 = vmatpush2.msra.mxu0 0.0
    %204 = vmatprep.mubr.f32.mxu0 0.0
    %205 = vmatmul.mubr.f32.gmra.mxu0 %v135
    %v206 = vpop.f32.mrf.mxu0
    %v207 = vadd.f32 0.0, %v206
    %v208 = vpop.f32.mrf.mxu0
    %209 = vmatprep.mubr.f32.mxu0 0.0
    %210 = vmatmul.mubr.f32.gmra.mxu0 %v138
    %v211 = vpop.f32.mrf.mxu0
    %v212 = vadd.f32 0.0, %v211
    %v213 = vpop.f32.mrf.mxu0
    %214 = vdwg.mxu0
    %v215 = vld [vmem:[%s8] sm:$0xff]
    %v216 = vld [vmem:[%s8 + $0x8] sm:$0xff]
    %v217 = vld [vmem:[%s8 + $0x10] sm:$0xff]
    %v218 = vld [vmem:[%s8 + $0x18] sm:$0xff]
    %219 = vmatprep.subr.mxu0 0.0
    %220 = vmatpush1.msra.mxu0 0.0
    %221 = vmatprep.subr.mxu0 0.0
    %222 = vmatpush1.msra.mxu0 0.0
    %223 = vmatprep.subr.mxu0 0.0
    %224 = vmatpush1.msra.mxu0 0.0
    %225 = vmatprep.subr.mxu0 0.0
    %226 = vmatpush1.msra.mxu0 0.0
    %227 = vmatprep.subr.mxu0 0.0
    %228 = vmatpush1.msra.mxu0 0.0
    %229 = vmatprep.subr.mxu0 0.0
    %230 = vmatpush1.msra.mxu0 0.0
    %231 = vmatprep.subr.mxu0 0.0
    %232 = vmatpush1.msra.mxu0 0.0
    %233 = vmatprep.subr.mxu0 0.0
    %234 = vmatpush1.msra.mxu0 0.0
    %235 = vmatprep.subr.mxu0 0.0
    %236 = vmatpush1.msra.mxu0 0.0
    %237 = vmatprep.subr.mxu0 0.0
    %238 = vmatpush1.msra.mxu0 0.0
    %239 = vmatprep.subr.mxu0 0.0
    %240 = vmatpush1.msra.mxu0 0.0
    %241 = vmatprep.subr.mxu0 0.0
    %242 = vmatpush1.msra.mxu0 0.0
    %243 = vmatprep.subr.mxu0 0.0
    %244 = vmatpush1.msra.mxu0 %v218
    %245 = vmatprep.subr.mxu0 0.0
    %246 = vmatpush1.msra.mxu0 %v217
    %247 = vmatprep.subr.mxu0 0.0
    %248 = vmatpush1.msra.mxu0 %v216
    %249 = vmatprep.subr.mxu0 0.0
    %250 = vmatpush1.msra.mxu0 %v215
    %251 = vmatprep.subr.mxu0 0.0
    %252 = vmatpush2.msra.mxu0 0.0
    %253 = vmatprep.subr.mxu0 0.0
    %254 = vmatpush2.msra.mxu0 0.0
    %255 = vmatprep.subr.mxu0 0.0
    %256 = vmatpush2.msra.mxu0 0.0
    %257 = vmatprep.subr.mxu0 0.0
    %258 = vmatpush2.msra.mxu0 0.0
    %259 = vmatprep.subr.mxu0 0.0
    %260 = vmatpush2.msra.mxu0 0.0
    %261 = vmatprep.subr.mxu0 0.0
    %262 = vmatpush2.msra.mxu0 0.0
    %263 = vmatprep.subr.mxu0 0.0
    %264 = vmatpush2.msra.mxu0 0.0
    %265 = vmatprep.subr.mxu0 0.0
    %266 = vmatpush2.msra.mxu0 0.0
    %267 = vmatprep.subr.mxu0 0.0
    %268 = vmatpush2.msra.mxu0 0.0
    %269 = vmatprep.subr.mxu0 0.0
    %270 = vmatpush2.msra.mxu0 0.0
    %271 = vmatprep.subr.mxu0 0.0
    %272 = vmatpush2.msra.mxu0 0.0
    %273 = vmatprep.subr.mxu0 0.0
    %274 = vmatpush2.msra.mxu0 0.0
    %275 = vmatprep.subr.mxu0 0.0
    %276 = vmatpush2.msra.mxu0 0.0
    %277 = vmatprep.subr.mxu0 0.0
    %278 = vmatpush2.msra.mxu0 0.0
    %279 = vmatprep.subr.mxu0 0.0
    %280 = vmatpush2.msra.mxu0 0.0
    %281 = vmatprep.subr.mxu0 0.0
    %282 = vmatpush2.msra.mxu0 0.0
    %283 = vmatprep.mubr.f32.mxu0 0.0
    %284 = vmatmul.mubr.f32.gmra.mxu0 %v135
    %v285 = vpop.f32.mrf.mxu0
    %v286 = vadd.f32 0.0, %v285
    %v287 = vpop.f32.mrf.mxu0
    %288 = vmatprep.mubr.f32.mxu0 0.0
    %289 = vmatmul.mubr.f32.gmra.mxu0 %v138
    %v290 = vpop.f32.mrf.mxu0
    %v291 = vadd.f32 0.0, %v290
    %v292 = vpop.f32.mrf.mxu0
    %293 = vdwg.mxu0
    %v294 = vld [vmem:[%s9] sm:$0xff]
    %v295 = vld [vmem:[%s9 + $0x8] sm:$0xff]
    %v296 = vld [vmem:[%s9 + $0x10] sm:$0xff]
    %v297 = vld [vmem:[%s9 + $0x18] sm:$0xff]
    %298 = vmatprep.subr.mxu0 0.0
    %299 = vmatpush1.msra.mxu0 0.0
    %300 = vmatprep.subr.mxu0 0.0
    %301 = vmatpush1.msra.mxu0 0.0
    %302 = vmatprep.subr.mxu0 0.0
    %303 = vmatpush1.msra.mxu0 0.0
    %304 = vmatprep.subr.mxu0 0.0
    %305 = vmatpush1.msra.mxu0 0.0
    %306 = vmatprep.subr.mxu0 0.0
    %307 = vmatpush1.msra.mxu0 0.0
    %308 = vmatprep.subr.mxu0 0.0
    %309 = vmatpush1.msra.mxu0 0.0
    %310 = vmatprep.subr.mxu0 0.0
    %311 = vmatpush1.msra.mxu0 0.0
    %312 = vmatprep.subr.mxu0 0.0
    %313 = vmatpush1.msra.mxu0 0.0
    %314 = vmatprep.subr.mxu0 0.0
    %315 = vmatpush1.msra.mxu0 0.0
    %316 = vmatprep.subr.mxu0 0.0
    %317 = vmatpush1.msra.mxu0 0.0
    %318 = vmatprep.subr.mxu0 0.0
    %319 = vmatpush1.msra.mxu0 0.0
    %320 = vmatprep.subr.mxu0 0.0
    %321 = vmatpush1.msra.mxu0 0.0
    %322 = vmatprep.subr.mxu0 0.0
    %323 = vmatpush1.msra.mxu0 %v297
    %324 = vmatprep.subr.mxu0 0.0
    %325 = vmatpush1.msra.mxu0 %v296
    %326 = vmatprep.subr.mxu0 0.0
    %327 = vmatpush1.msra.mxu0 %v295
    %328 = vmatprep.subr.mxu0 0.0
    %329 = vmatpush1.msra.mxu0 %v294
    %330 = vmatprep.subr.mxu0 0.0
    %331 = vmatpush2.msra.mxu0 0.0
    %332 = vmatprep.subr.mxu0 0.0
    %333 = vmatpush2.msra.mxu0 0.0
    %334 = vmatprep.subr.mxu0 0.0
    %335 = vmatpush2.msra.mxu0 0.0
    %336 = vmatprep.subr.mxu0 0.0
    %337 = vmatpush2.msra.mxu0 0.0
    %338 = vmatprep.subr.mxu0 0.0
    %339 = vmatpush2.msra.mxu0 0.0
    %340 = vmatprep.subr.mxu0 0.0
    %341 = vmatpush2.msra.mxu0 0.0
    %342 = vmatprep.subr.mxu0 0.0
    %343 = vmatpush2.msra.mxu0 0.0
    %344 = vmatprep.subr.mxu0 0.0
    %345 = vmatpush2.msra.mxu0 0.0
    %346 = vmatprep.subr.mxu0 0.0
    %347 = vmatpush2.msra.mxu0 0.0
    %348 = vmatprep.subr.mxu0 0.0
    %349 = vmatpush2.msra.mxu0 0.0
    %350 = vmatprep.subr.mxu0 0.0
    %351 = vmatpush2.msra.mxu0 0.0
    %352 = vmatprep.subr.mxu0 0.0
    %353 = vmatpush2.msra.mxu0 0.0
    %354 = vmatprep.subr.mxu0 0.0
    %355 = vmatpush2.msra.mxu0 0.0
    %356 = vmatprep.subr.mxu0 0.0
    %357 = vmatpush2.msra.mxu0 0.0
    %358 = vmatprep.subr.mxu0 0.0
    %359 = vmatpush2.msra.mxu0 0.0
    %360 = vmatprep.subr.mxu0 0.0
    %361 = vmatpush2.msra.mxu0 0.0
    %362 = vmatprep.mubr.f32.mxu0 0.0
    %363 = vmatmul.mubr.f32.gmra.mxu0 %v135
    %v364 = vpop.f32.mrf.mxu0
    %v365 = vadd.f32 0.0, %v364
    %v366 = vpop.f32.mrf.mxu0
    %367 = vmatprep.mubr.f32.mxu0 0.0
    %368 = vmatmul.mubr.f32.gmra.mxu0 %v138
    %v369 = vpop.f32.mrf.mxu0
    %v370 = vadd.f32 0.0, %v369
    %v371 = vpop.f32.mrf.mxu0
    %372 = vdwg.mxu0
    %v373 = vld [vmem:[%s11] sm:$0x1]
    %v374 = vmul.f32 %v207, %v207
    %v375 = vmul.f32 %v212, %v212
    %v376 = vsel %vm133, %v374, 0.0
    %377 = vadd.xlane.f32.xlu0 %v376
    %v378 = vpop.xlane.xlu0 %377
    %v379 = vsel %vm133, %v375, 0.0
    %380 = vadd.xlane.f32.xlu0 %v379
    %v381 = vpop.xlane.xlu0 %380
    %v382 = vrcp.pop 32.0
    %v383 = vmul.f32 %v378, %v382
    %v384 = vmul.f32 %v381, %v382
    %v385 = vadd.f32 %v383, 1e-06
    %v386 = vadd.f32 %v384, 1e-06
    %v387 = vrsqrt.pop %v385
    %v388 = vrsqrt.pop %v386
    %v389 = vmul.f32 %v207, %v387
    %v390 = vmul.f32 %v212, %v388
    %v392 = vlaneseq
    %v393 = vshrl.u32 %v392, 7
    %v394 = vsub.s32 0, %v393
    %v395 = vrot.slane %v373, %v394
    %v397 = vmul.f32 %v389, %v395
    %v398 = vmul.f32 %v390, %v395
    %v399 = vld [vmem:[%s12] sm:$0x1]
    %v400 = vmul.f32 %v286, %v286
    %v401 = vmul.f32 %v291, %v291
    %vm402 = vcmask 130048
    %v403 = vsel %vm402, %v400, 0.0
    %404 = vadd.xlane.f32.xlu0 %v403
    %v405 = vpop.xlane.xlu0 %404
    %v406 = vsel %vm402, %v401, 0.0
    %407 = vadd.xlane.f32.xlu0 %v406
    %v408 = vpop.xlane.xlu0 %407
    %v409 = vrcp.pop 16.0
    %v410 = vmul.f32 %v405, %v409
    %v411 = vmul.f32 %v408, %v409
    %v412 = vadd.f32 %v410, 1e-06
    %v413 = vadd.f32 %v411, 1e-06
    %v414 = vrsqrt.pop %v412
    %v415 = vrsqrt.pop %v413
    %v416 = vmul.f32 %v286, %v414
    %v417 = vmul.f32 %v291, %v415
    %v419 = vlaneseq
    %v420 = vshrl.u32 %v419, 7
    %v421 = vsub.s32 0, %v420
    %v422 = vrot.slane %v399, %v421
    %v424 = vmul.f32 %v416, %v422
    %v425 = vmul.f32 %v417, %v422
    %v426 = vld [vmem:[#allocation5] sm:$0xff]
    %v427 = vld [vmem:[#allocation5 + $0x8] sm:$0xff]
    %v428 = vmul.f32 %v397, %v426
    %v429 = vmul.f32 %v398, %v427
    %v430 = vld [vmem:[%s3] sm:$0xff]
    %v431 = vld [vmem:[%s3 + $0x8] sm:$0xff]
    %v432 = vld [vmem:[%s3 + $0x10] sm:$0xff]
    %v433 = vld [vmem:[%s3 + $0x18] sm:$0xff]
    %v435 = vsel %vm133, %v397, 0
    %v438 = vsel %vm133, %v398, 0
    %440 = vmatprep.subr.mxu0 0.0
    %441 = vmatpush1.msra.mxu0 0.0
    %442 = vmatprep.subr.mxu0 0.0
    %443 = vmatpush1.msra.mxu0 0.0
    %444 = vmatprep.subr.mxu0 0.0
    %445 = vmatpush1.msra.mxu0 0.0
    %446 = vmatprep.subr.mxu0 0.0
    %447 = vmatpush1.msra.mxu0 0.0
    %448 = vmatprep.subr.mxu0 0.0
    %449 = vmatpush1.msra.mxu0 0.0
    %450 = vmatprep.subr.mxu0 0.0
    %451 = vmatpush1.msra.mxu0 0.0
    %452 = vmatprep.subr.mxu0 0.0
    %453 = vmatpush1.msra.mxu0 0.0
    %454 = vmatprep.subr.mxu0 0.0
    %455 = vmatpush1.msra.mxu0 0.0
    %456 = vmatprep.subr.mxu0 0.0
    %457 = vmatpush1.msra.mxu0 0.0
    %458 = vmatprep.subr.mxu0 0.0
    %459 = vmatpush1.msra.mxu0 0.0
    %460 = vmatprep.subr.mxu0 0.0
    %461 = vmatpush1.msra.mxu0 0.0
    %462 = vmatprep.subr.mxu0 0.0
    %463 = vmatpush1.msra.mxu0 0.0
    %464 = vmatprep.subr.mxu0 0.0
    %465 = vmatpush1.msra.mxu0 %v433
    %466 = vmatprep.subr.mxu0 0.0
    %467 = vmatpush1.msra.mxu0 %v432
    %468 = vmatprep.subr.mxu0 0.0
    %469 = vmatpush1.msra.mxu0 %v431
    %470 = vmatprep.subr.mxu0 0.0
    %471 = vmatpush1.msra.mxu0 %v430
    %472 = vmatprep.subr.mxu0 0.0
    %473 = vmatpush2.msra.mxu0 0.0
    %474 = vmatprep.subr.mxu0 0.0
    %475 = vmatpush2.msra.mxu0 0.0
    %476 = vmatprep.subr.mxu0 0.0
    %477 = vmatpush2.msra.mxu0 0.0
    %478 = vmatprep.subr.mxu0 0.0
    %479 = vmatpush2.msra.mxu0 0.0
    %480 = vmatprep.subr.mxu0 0.0
    %481 = vmatpush2.msra.mxu0 0.0
    %482 = vmatprep.subr.mxu0 0.0
    %483 = vmatpush2.msra.mxu0 0.0
    %484 = vmatprep.subr.mxu0 0.0
    %485 = vmatpush2.msra.mxu0 0.0
    %486 = vmatprep.subr.mxu0 0.0
    %487 = vmatpush2.msra.mxu0 0.0
    %488 = vmatprep.subr.mxu0 0.0
    %489 = vmatpush2.msra.mxu0 0.0
    %490 = vmatprep.subr.mxu0 0.0
    %491 = vmatpush2.msra.mxu0 0.0
    %492 = vmatprep.subr.mxu0 0.0
    %493 = vmatpush2.msra.mxu0 0.0
    %494 = vmatprep.subr.mxu0 0.0
    %495 = vmatpush2.msra.mxu0 0.0
    %496 = vmatprep.subr.mxu0 0.0
    %497 = vmatpush2.msra.mxu0 0.0
    %498 = vmatprep.subr.mxu0 0.0
    %499 = vmatpush2.msra.mxu0 0.0
    %500 = vmatprep.subr.mxu0 0.0
    %501 = vmatpush2.msra.mxu0 0.0
    %502 = vmatprep.subr.mxu0 0.0
    %503 = vmatpush2.msra.mxu0 0.0
    %504 = vmatprep.mubr.f32.mxu0 0.0
    %505 = vmatmul.mubr.f32.gmra.mxu0 %v435
    %v506 = vpop.f32.mrf.mxu0
    %v507 = vadd.f32 0.0, %v506
    %v508 = vpop.f32.mrf.mxu0
    %509 = vmatprep.mubr.f32.mxu0 0.0
    %510 = vmatmul.mubr.f32.gmra.mxu0 %v438
    %v511 = vpop.f32.mrf.mxu0
    %v512 = vadd.f32 0.0, %v511
    %v513 = vpop.f32.mrf.mxu0
    %514 = vdwg.mxu0
    %v515 = vld [vmem:[#allocation7] sm:$0xff]
    %v516 = vld [vmem:[#allocation7 + $0x8] sm:$0xff]
    %v517 = vmul.f32 %v507, %v515
    %v518 = vmul.f32 %v512, %v516
    %v519 = vadd.f32 %v428, %v517
    %v520 = vadd.f32 %v429, %v518
    %v521 = vld [vmem:[#allocation8] sm:$0xff]
    %v522 = vld [vmem:[#allocation8 + $0x8] sm:$0xff]
    %v523 = vmul.f32 %v424, %v521
    %v524 = vmul.f32 %v425, %v522
    %v525 = vld [vmem:[#allocation11] sm:$0xff]
    %v526 = vld [vmem:[#allocation11 + $0x8] sm:$0xff]
    %v528 = vsel %vm402, %v424, 0
    %v531 = vsel %vm402, %v425, 0
    %533 = vmatprep.subr.mxu0 0.0
    %534 = vmatpush1.msra.mxu0 0.0
    %535 = vmatprep.subr.mxu0 0.0
    %536 = vmatpush1.msra.mxu0 0.0
    %537 = vmatprep.subr.mxu0 0.0
    %538 = vmatpush1.msra.mxu0 0.0
    %539 = vmatprep.subr.mxu0 0.0
    %540 = vmatpush1.msra.mxu0 0.0
    %541 = vmatprep.subr.mxu0 0.0
    %542 = vmatpush1.msra.mxu0 0.0
    %543 = vmatprep.subr.mxu0 0.0
    %544 = vmatpush1.msra.mxu0 0.0
    %545 = vmatprep.subr.mxu0 0.0
    %546 = vmatpush1.msra.mxu0 0.0
    %547 = vmatprep.subr.mxu0 0.0
    %548 = vmatpush1.msra.mxu0 0.0
    %549 = vmatprep.subr.mxu0 0.0
    %550 = vmatpush1.msra.mxu0 0.0
    %551 = vmatprep.subr.mxu0 0.0
    %552 = vmatpush1.msra.mxu0 0.0
    %553 = vmatprep.subr.mxu0 0.0
    %554 = vmatpush1.msra.mxu0 0.0
    %555 = vmatprep.subr.mxu0 0.0
    %556 = vmatpush1.msra.mxu0 0.0
    %557 = vmatprep.subr.mxu0 0.0
    %558 = vmatpush1.msra.mxu0 0.0
    %559 = vmatprep.subr.mxu0 0.0
    %560 = vmatpush1.msra.mxu0 0.0
    %561 = vmatprep.subr.mxu0 0.0
    %562 = vmatpush1.msra.mxu0 %v526
    %563 = vmatprep.subr.mxu0 0.0
    %564 = vmatpush1.msra.mxu0 %v525
    %565 = vmatprep.subr.mxu0 0.0
    %566 = vmatpush2.msra.mxu0 0.0
    %567 = vmatprep.subr.mxu0 0.0
    %568 = vmatpush2.msra.mxu0 0.0
    %569 = vmatprep.subr.mxu0 0.0
    %570 = vmatpush2.msra.mxu0 0.0
    %571 = vmatprep.subr.mxu0 0.0
    %572 = vmatpush2.msra.mxu0 0.0
    %573 = vmatprep.subr.mxu0 0.0
    %574 = vmatpush2.msra.mxu0 0.0
    %575 = vmatprep.subr.mxu0 0.0
    %576 = vmatpush2.msra.mxu0 0.0
    %577 = vmatprep.subr.mxu0 0.0
    %578 = vmatpush2.msra.mxu0 0.0
    %579 = vmatprep.subr.mxu0 0.0
    %580 = vmatpush2.msra.mxu0 0.0
    %581 = vmatprep.subr.mxu0 0.0
    %582 = vmatpush2.msra.mxu0 0.0
    %583 = vmatprep.subr.mxu0 0.0
    %584 = vmatpush2.msra.mxu0 0.0
    %585 = vmatprep.subr.mxu0 0.0
    %586 = vmatpush2.msra.mxu0 0.0
    %587 = vmatprep.subr.mxu0 0.0
    %588 = vmatpush2.msra.mxu0 0.0
    %589 = vmatprep.subr.mxu0 0.0
    %590 = vmatpush2.msra.mxu0 0.0
    %591 = vmatprep.subr.mxu0 0.0
    %592 = vmatpush2.msra.mxu0 0.0
    %593 = vmatprep.subr.mxu0 0.0
    %594 = vmatpush2.msra.mxu0 0.0
    %595 = vmatprep.subr.mxu0 0.0
    %596 = vmatpush2.msra.mxu0 0.0
    %597 = vmatprep.mubr.f32.mxu0 0.0
    %598 = vmatmul.mubr.f32.gmra.mxu0 %v528
    %v599 = vpop.f32.mrf.mxu0
    %v600 = vadd.f32 0.0, %v599
    %v601 = vpop.f32.mrf.mxu0
    %602 = vmatprep.mubr.f32.mxu0 0.0
    %603 = vmatmul.mubr.f32.gmra.mxu0 %v531
    %v604 = vpop.f32.mrf.mxu0
    %v605 = vadd.f32 0.0, %v604
    %v606 = vpop.f32.mrf.mxu0
    %607 = vdwg.mxu0
    %v608 = vld [vmem:[#allocation10] sm:$0xff]
    %v609 = vld [vmem:[#allocation10 + $0x8] sm:$0xff]
    %v610 = vmul.f32 %v600, %v608
    %v611 = vmul.f32 %v605, %v609
    %v612 = vadd.f32 %v523, %v610
    %v613 = vadd.f32 %v524, %v611
    %615 = vrot.lane.b32.xlu0 %v519, 120
    %v616 = vpop.permute.xlu0 %615
    %vm617 = vcmask 64512
    %v618 = vsel %vm617, %v519, 0
    %v620 = vsel %vm617, %v616, 0
    %v623 = vsel %vm617, %v612, 0
    %625 = vmatprep.subr.mxu0 0.0
    %626 = vmatpush1.xpose.msra.mxu0 0.0
    %627 = vmatprep.subr.mxu0 0.0
    %628 = vmatpush1.xpose.msra.mxu0 0.0
    %629 = vmatprep.subr.mxu0 0.0
    %630 = vmatpush1.xpose.msra.mxu0 0.0
    %631 = vmatprep.subr.mxu0 0.0
    %632 = vmatpush1.xpose.msra.mxu0 0.0
    %633 = vmatprep.subr.mxu0 0.0
    %634 = vmatpush1.xpose.msra.mxu0 0.0
    %635 = vmatprep.subr.mxu0 0.0
    %636 = vmatpush1.xpose.msra.mxu0 0.0
    %637 = vmatprep.subr.mxu0 0.0
    %638 = vmatpush1.xpose.msra.mxu0 0.0
    %639 = vmatprep.subr.mxu0 0.0
    %640 = vmatpush1.xpose.msra.mxu0 0.0
    %641 = vmatprep.subr.mxu0 0.0
    %642 = vmatpush1.xpose.msra.mxu0 0.0
    %643 = vmatprep.subr.mxu0 0.0
    %644 = vmatpush1.xpose.msra.mxu0 0.0
    %645 = vmatprep.subr.mxu0 0.0
    %646 = vmatpush1.xpose.msra.mxu0 0.0
    %647 = vmatprep.subr.mxu0 0.0
    %648 = vmatpush1.xpose.msra.mxu0 0.0
    %649 = vmatprep.subr.mxu0 0.0
    %650 = vmatpush1.xpose.msra.mxu0 0.0
    %651 = vmatprep.subr.mxu0 0.0
    %652 = vmatpush1.xpose.msra.mxu0 0.0
    %653 = vmatprep.subr.mxu0 0.0
    %654 = vmatpush1.xpose.msra.mxu0 0.0
    %655 = vmatprep.subr.mxu0 0.0
    %656 = vmatpush1.xpose.msra.mxu0 %v623
    %657 = vmatprep.subr.mxu0 0.0
    %658 = vmatpush2.xpose.msra.mxu0 0.0
    %659 = vmatprep.subr.mxu0 0.0
    %660 = vmatpush2.xpose.msra.mxu0 0.0
    %661 = vmatprep.subr.mxu0 0.0
    %662 = vmatpush2.xpose.msra.mxu0 0.0
    %663 = vmatprep.subr.mxu0 0.0
    %664 = vmatpush2.xpose.msra.mxu0 0.0
    %665 = vmatprep.subr.mxu0 0.0
    %666 = vmatpush2.xpose.msra.mxu0 0.0
    %667 = vmatprep.subr.mxu0 0.0
    %668 = vmatpush2.xpose.msra.mxu0 0.0
    %669 = vmatprep.subr.mxu0 0.0
    %670 = vmatpush2.xpose.msra.mxu0 0.0
    %671 = vmatprep.subr.mxu0 0.0
    %672 = vmatpush2.xpose.msra.mxu0 0.0
    %673 = vmatprep.subr.mxu0 0.0
    %674 = vmatpush2.xpose.msra.mxu0 0.0
    %675 = vmatprep.subr.mxu0 0.0
    %676 = vmatpush2.xpose.msra.mxu0 0.0
    %677 = vmatprep.subr.mxu0 0.0
    %678 = vmatpush2.xpose.msra.mxu0 0.0
    %679 = vmatprep.subr.mxu0 0.0
    %680 = vmatpush2.xpose.msra.mxu0 0.0
    %681 = vmatprep.subr.mxu0 0.0
    %682 = vmatpush2.xpose.msra.mxu0 0.0
    %683 = vmatprep.subr.mxu0 0.0
    %684 = vmatpush2.xpose.msra.mxu0 0.0
    %685 = vmatprep.subr.mxu0 0.0
    %686 = vmatpush2.xpose.msra.mxu0 0.0
    %687 = vmatprep.subr.mxu0 0.0
    %688 = vmatpush2.xpose.msra.mxu0 0.0
    %689 = vmatprep.mubr.f32.mxu0 0.0
    %690 = vmatmul.mubr.f32.gmra.mxu0 %v618
    %v691 = vpop.f32.mrf.mxu0
    %v692 = vadd.f32 0.0, %v691
    %v693 = vpop.f32.mrf.mxu0
    %694 = vmatprep.mubr.f32.mxu0 0.0
    %695 = vmatmul.mubr.f32.gmra.mxu0 %v620
    %v696 = vpop.f32.mrf.mxu0
    %v697 = vadd.f32 0.0, %v696
    %v698 = vpop.f32.mrf.mxu0
    %699 = vdwg.mxu0
    %v700 = vmul.f32 %v692, 0.35355338
    %v701 = vmul.f32 %v697, 0.35355338
    %v702 = vsel %vm617, %v700, -inf
    %703 = vmax.xlane.f32.xlu0 %v702
    %v704 = vpop.xlane.xlu0 %703
    %v705 = vsel %vm617, %v701, -inf
    %706 = vmax.xlane.f32.xlu0 %v705
    %v707 = vpop.xlane.xlu0 %706
    %v708 = vsub.f32 %v700, %v704
    %v709 = vsub.f32 %v701, %v707
    %v710 = vmul.f32 %v708, 1.442695
    %v711 = vpow.pop %v710
    %v712 = vmul.f32 %v709, 1.442695
    %v713 = vpow.pop %v712
    %v714 = vsel %vm617, %v711, 0.0
    %715 = vadd.xlane.f32.xlu0 %v714
    %v716 = vpop.xlane.xlu0 %715
    %v717 = vsel %vm617, %v713, 0.0
    %718 = vadd.xlane.f32.xlu0 %v717
    %v719 = vpop.xlane.xlu0 %718
    %v720 = vrcp.pop %v716
    %v721 = vrcp.pop %v719
    %v722 = vmul.f32 %v711, %v720
    %v723 = vmul.f32 %v713, %v721
    %v725 = vsel %vm617, %v722, 0
    %v728 = vsel %vm617, %v723, 0
    %730 = vmatprep.subr.mxu0 0.0
    %731 = vmatpush1.msra.mxu0 0.0
    %732 = vmatprep.subr.mxu0 0.0
    %733 = vmatpush1.msra.mxu0 0.0
    %734 = vmatprep.subr.mxu0 0.0
    %735 = vmatpush1.msra.mxu0 0.0
    %736 = vmatprep.subr.mxu0 0.0
    %737 = vmatpush1.msra.mxu0 0.0
    %738 = vmatprep.subr.mxu0 0.0
    %739 = vmatpush1.msra.mxu0 0.0
    %740 = vmatprep.subr.mxu0 0.0
    %741 = vmatpush1.msra.mxu0 0.0
    %742 = vmatprep.subr.mxu0 0.0
    %743 = vmatpush1.msra.mxu0 0.0
    %744 = vmatprep.subr.mxu0 0.0
    %745 = vmatpush1.msra.mxu0 0.0
    %746 = vmatprep.subr.mxu0 0.0
    %747 = vmatpush1.msra.mxu0 0.0
    %748 = vmatprep.subr.mxu0 0.0
    %749 = vmatpush1.msra.mxu0 0.0
    %750 = vmatprep.subr.mxu0 0.0
    %751 = vmatpush1.msra.mxu0 0.0
    %752 = vmatprep.subr.mxu0 0.0
    %753 = vmatpush1.msra.mxu0 0.0
    %754 = vmatprep.subr.mxu0 0.0
    %755 = vmatpush1.msra.mxu0 0.0
    %756 = vmatprep.subr.mxu0 0.0
    %757 = vmatpush1.msra.mxu0 0.0
    %758 = vmatprep.subr.mxu0 0.0
    %759 = vmatpush1.msra.mxu0 0.0
    %760 = vmatprep.subr.mxu0 0.0
    %761 = vmatpush1.msra.mxu0 %v365
    %762 = vmatprep.subr.mxu0 0.0
    %763 = vmatpush2.msra.mxu0 0.0
    %764 = vmatprep.subr.mxu0 0.0
    %765 = vmatpush2.msra.mxu0 0.0
    %766 = vmatprep.subr.mxu0 0.0
    %767 = vmatpush2.msra.mxu0 0.0
    %768 = vmatprep.subr.mxu0 0.0
    %769 = vmatpush2.msra.mxu0 0.0
    %770 = vmatprep.subr.mxu0 0.0
    %771 = vmatpush2.msra.mxu0 0.0
    %772 = vmatprep.subr.mxu0 0.0
    %773 = vmatpush2.msra.mxu0 0.0
    %774 = vmatprep.subr.mxu0 0.0
    %775 = vmatpush2.msra.mxu0 0.0
    %776 = vmatprep.subr.mxu0 0.0
    %777 = vmatpush2.msra.mxu0 0.0
    %778 = vmatprep.subr.mxu0 0.0
    %779 = vmatpush2.msra.mxu0 0.0
    %780 = vmatprep.subr.mxu0 0.0
    %781 = vmatpush2.msra.mxu0 0.0
    %782 = vmatprep.subr.mxu0 0.0
    %783 = vmatpush2.msra.mxu0 0.0
    %784 = vmatprep.subr.mxu0 0.0
    %785 = vmatpush2.msra.mxu0 0.0
    %786 = vmatprep.subr.mxu0 0.0
    %787 = vmatpush2.msra.mxu0 0.0
    %788 = vmatprep.subr.mxu0 0.0
    %789 = vmatpush2.msra.mxu0 0.0
    %790 = vmatprep.subr.mxu0 0.0
    %791 = vmatpush2.msra.mxu0 0.0
    %792 = vmatprep.subr.mxu0 0.0
    %793 = vmatpush2.msra.mxu0 0.0
    %794 = vmatprep.mubr.f32.mxu0 0.0
    %795 = vmatmul.mubr.f32.gmra.mxu0 %v725
    %v796 = vpop.f32.mrf.mxu0
    %v797 = vadd.f32 0.0, %v796
    %v798 = vpop.f32.mrf.mxu0
    %799 = vmatprep.mubr.f32.mxu0 0.0
    %800 = vmatmul.mubr.f32.gmra.mxu0 %v728
    %v801 = vpop.f32.mrf.mxu0
    %v802 = vadd.f32 0.0, %v801
    %v803 = vpop.f32.mrf.mxu0
    %804 = vdwg.mxu0
    %v805 = vld [vmem:[%s10] sm:$0xff]
    %v806 = vld [vmem:[%s10 + $0x8] sm:$0xff]
    %v808 = vsel %vm617, %v802, 0
    %810 = vmatprep.subr.mxu0 0.0
    %811 = vmatpush1.msra.mxu0 0.0
    %812 = vmatprep.subr.mxu0 0.0
    %813 = vmatpush1.msra.mxu0 0.0
    %814 = vmatprep.subr.mxu0 0.0
    %815 = vmatpush1.msra.mxu0 0.0
    %816 = vmatprep.subr.mxu0 0.0
    %817 = vmatpush1.msra.mxu0 0.0
    %818 = vmatprep.subr.mxu0 0.0
    %819 = vmatpush1.msra.mxu0 0.0
    %820 = vmatprep.subr.mxu0 0.0
    %821 = vmatpush1.msra.mxu0 0.0
    %822 = vmatprep.subr.mxu0 0.0
    %823 = vmatpush1.msra.mxu0 0.0
    %824 = vmatprep.subr.mxu0 0.0
    %825 = vmatpush1.msra.mxu0 0.0
    %826 = vmatprep.subr.mxu0 0.0
    %827 = vmatpush1.msra.mxu0 0.0
    %828 = vmatprep.subr.mxu0 0.0
    %829 = vmatpush1.msra.mxu0 0.0
    %830 = vmatprep.subr.mxu0 0.0
    %831 = vmatpush1.msra.mxu0 0.0
    %832 = vmatprep.subr.mxu0 0.0
    %833 = vmatpush1.msra.mxu0 0.0
    %834 = vmatprep.subr.mxu0 0.0
    %835 = vmatpush1.msra.mxu0 0.0
    %836 = vmatprep.subr.mxu0 0.0
    %837 = vmatpush1.msra.mxu0 0.0
    %838 = vmatprep.subr.mxu0 0.0
    %839 = vmatpush1.msra.mxu0 0.0
    %840 = vmatprep.subr.mxu0 0.0
    %841 = vmatpush1.msra.mxu0 %v806
    %842 = vmatprep.subr.mxu0 0.0
    %843 = vmatpush2.msra.mxu0 0.0
    %844 = vmatprep.subr.mxu0 0.0
    %845 = vmatpush2.msra.mxu0 0.0
    %846 = vmatprep.subr.mxu0 0.0
    %847 = vmatpush2.msra.mxu0 0.0
    %848 = vmatprep.subr.mxu0 0.0
    %849 = vmatpush2.msra.mxu0 0.0
    %850 = vmatprep.subr.mxu0 0.0
    %851 = vmatpush2.msra.mxu0 0.0
    %852 = vmatprep.subr.mxu0 0.0
    %853 = vmatpush2.msra.mxu0 0.0
    %854 = vmatprep.subr.mxu0 0.0
    %855 = vmatpush2.msra.mxu0 0.0
    %856 = vmatprep.subr.mxu0 0.0
    %857 = vmatpush2.msra.mxu0 0.0
    %858 = vmatprep.subr.mxu0 0.0
    %859 = vmatpush2.msra.mxu0 0.0
    %860 = vmatprep.subr.mxu0 0.0
    %861 = vmatpush2.msra.mxu0 0.0
    %862 = vmatprep.subr.mxu0 0.0
    %863 = vmatpush2.msra.mxu0 0.0
    %864 = vmatprep.subr.mxu0 0.0
    %865 = vmatpush2.msra.mxu0 0.0
    %866 = vmatprep.subr.mxu0 0.0
    %867 = vmatpush2.msra.mxu0 0.0
    %868 = vmatprep.subr.mxu0 0.0
    %869 = vmatpush2.msra.mxu0 0.0
    %870 = vmatprep.subr.mxu0 0.0
    %871 = vmatpush2.msra.mxu0 0.0
    %872 = vmatprep.subr.mxu0 0.0
    %873 = vmatpush2.msra.mxu0 0.0
    %874 = vmatprep.mubr.f32.mxu0 0.0
    %875 = vmatmul.mubr.f32.gmra.mxu0 %v808
    %v876 = vpop.f32.mrf.mxu0
    %v877 = vadd.f32 0.0, %v876
    %v878 = vpop.f32.mrf.mxu0
    %879 = vdwg.mxu0
    %v881 = vsel %vm617, %v797, 0
    %883 = vmatprep.subr.mxu0 0.0
    %884 = vmatpush1.msra.mxu0 0.0
    %885 = vmatprep.subr.mxu0 0.0
    %886 = vmatpush1.msra.mxu0 0.0
    %887 = vmatprep.subr.mxu0 0.0
    %888 = vmatpush1.msra.mxu0 0.0
    %889 = vmatprep.subr.mxu0 0.0
    %890 = vmatpush1.msra.mxu0 0.0
    %891 = vmatprep.subr.mxu0 0.0
    %892 = vmatpush1.msra.mxu0 0.0
    %893 = vmatprep.subr.mxu0 0.0
    %894 = vmatpush1.msra.mxu0 0.0
    %895 = vmatprep.subr.mxu0 0.0
    %896 = vmatpush1.msra.mxu0 0.0
    %897 = vmatprep.subr.mxu0 0.0
    %898 = vmatpush1.msra.mxu0 0.0
    %899 = vmatprep.subr.mxu0 0.0
    %900 = vmatpush1.msra.mxu0 0.0
    %901 = vmatprep.subr.mxu0 0.0
    %902 = vmatpush1.msra.mxu0 0.0
    %903 = vmatprep.subr.mxu0 0.0
    %904 = vmatpush1.msra.mxu0 0.0
    %905 = vmatprep.subr.mxu0 0.0
    %906 = vmatpush1.msra.mxu0 0.0
    %907 = vmatprep.subr.mxu0 0.0
    %908 = vmatpush1.msra.mxu0 0.0
    %909 = vmatprep.subr.mxu0 0.0
    %910 = vmatpush1.msra.mxu0 0.0
    %911 = vmatprep.subr.mxu0 0.0
    %912 = vmatpush1.msra.mxu0 0.0
    %913 = vmatprep.subr.mxu0 0.0
    %914 = vmatpush1.msra.mxu0 %v805
    %915 = vmatprep.subr.mxu0 0.0
    %916 = vmatpush2.msra.mxu0 0.0
    %917 = vmatprep.subr.mxu0 0.0
    %918 = vmatpush2.msra.mxu0 0.0
    %919 = vmatprep.subr.mxu0 0.0
    %920 = vmatpush2.msra.mxu0 0.0
    %921 = vmatprep.subr.mxu0 0.0
    %922 = vmatpush2.msra.mxu0 0.0
    %923 = vmatprep.subr.mxu0 0.0
    %924 = vmatpush2.msra.mxu0 0.0
    %925 = vmatprep.subr.mxu0 0.0
    %926 = vmatpush2.msra.mxu0 0.0
    %927 = vmatprep.subr.mxu0 0.0
    %928 = vmatpush2.msra.mxu0 0.0
    %929 = vmatprep.subr.mxu0 0.0
    %930 = vmatpush2.msra.mxu0 0.0
    %931 = vmatprep.subr.mxu0 0.0
    %932 = vmatpush2.msra.mxu0 0.0
    %933 = vmatprep.subr.mxu0 0.0
    %934 = vmatpush2.msra.mxu0 0.0
    %935 = vmatprep.subr.mxu0 0.0
    %936 = vmatpush2.msra.mxu0 0.0
    %937 = vmatprep.subr.mxu0 0.0
    %938 = vmatpush2.msra.mxu0 0.0
    %939 = vmatprep.subr.mxu0 0.0
    %940 = vmatpush2.msra.mxu0 0.0
    %941 = vmatprep.subr.mxu0 0.0
    %942 = vmatpush2.msra.mxu0 0.0
    %943 = vmatprep.subr.mxu0 0.0
    %944 = vmatpush2.msra.mxu0 0.0
    %945 = vmatprep.subr.mxu0 0.0
    %946 = vmatpush2.msra.mxu0 0.0
    %947 = vmatprep.mubr.f32.mxu0 0.0
    %948 = vmatmul.mubr.f32.gmra.mxu0 %v881
    %v949 = vpop.f32.mrf.mxu0
    %v950 = vadd.f32 %v877, %v949
    %v951 = vpop.f32.mrf.mxu0
    %952 = vdwg.mxu0
    %953 = vrot.lane.b32.xlu0 %v519, 112
    %v954 = vpop.permute.xlu0 %953
    %955 = vrot.lane.b32.xlu0 %v616, 112
    %v956 = vpop.permute.xlu0 %955
    %957 = vrot.lane.b32.xlu0 %v612, 120
    %v958 = vpop.permute.xlu0 %957
    %v959 = vsel %vm617, %v954, 0
    %v961 = vsel %vm617, %v956, 0
    %v963 = vsel %vm617, %v958, 0
    %965 = vmatprep.subr.mxu0 0.0
    %966 = vmatpush1.xpose.msra.mxu0 0.0
    %967 = vmatprep.subr.mxu0 0.0
    %968 = vmatpush1.xpose.msra.mxu0 0.0
    %969 = vmatprep.subr.mxu0 0.0
    %970 = vmatpush1.xpose.msra.mxu0 0.0
    %971 = vmatprep.subr.mxu0 0.0
    %972 = vmatpush1.xpose.msra.mxu0 0.0
    %973 = vmatprep.subr.mxu0 0.0
    %974 = vmatpush1.xpose.msra.mxu0 0.0
    %975 = vmatprep.subr.mxu0 0.0
    %976 = vmatpush1.xpose.msra.mxu0 0.0
    %977 = vmatprep.subr.mxu0 0.0
    %978 = vmatpush1.xpose.msra.mxu0 0.0
    %979 = vmatprep.subr.mxu0 0.0
    %980 = vmatpush1.xpose.msra.mxu0 0.0
    %981 = vmatprep.subr.mxu0 0.0
    %982 = vmatpush1.xpose.msra.mxu0 0.0
    %983 = vmatprep.subr.mxu0 0.0
    %984 = vmatpush1.xpose.msra.mxu0 0.0
    %985 = vmatprep.subr.mxu0 0.0
    %986 = vmatpush1.xpose.msra.mxu0 0.0
    %987 = vmatprep.subr.mxu0 0.0
    %988 = vmatpush1.xpose.msra.mxu0 0.0
    %989 = vmatprep.subr.mxu0 0.0
    %990 = vmatpush1.xpose.msra.mxu0 0.0
    %991 = vmatprep.subr.mxu0 0.0
    %992 = vmatpush1.xpose.msra.mxu0 0.0
    %993 = vmatprep.subr.mxu0 0.0
    %994 = vmatpush1.xpose.msra.mxu0 0.0
    %995 = vmatprep.subr.mxu0 0.0
    %996 = vmatpush1.xpose.msra.mxu0 %v963
    %997 = vmatprep.subr.mxu0 0.0
    %998 = vmatpush2.xpose.msra.mxu0 0.0
    %999 = vmatprep.subr.mxu0 0.0
    %1000 = vmatpush2.xpose.msra.mxu0 0.0
    %1001 = vmatprep.subr.mxu0 0.0
    %1002 = vmatpush2.xpose.msra.mxu0 0.0
    %1003 = vmatprep.subr.mxu0 0.0
    %1004 = vmatpush2.xpose.msra.mxu0 0.0
    %1005 = vmatprep.subr.mxu0 0.0
    %1006 = vmatpush2.xpose.msra.mxu0 0.0
    %1007 = vmatprep.subr.mxu0 0.0
    %1008 = vmatpush2.xpose.msra.mxu0 0.0
    %1009 = vmatprep.subr.mxu0 0.0
    %1010 = vmatpush2.xpose.msra.mxu0 0.0
    %1011 = vmatprep.subr.mxu0 0.0
    %1012 = vmatpush2.xpose.msra.mxu0 0.0
    %1013 = vmatprep.subr.mxu0 0.0
    %1014 = vmatpush2.xpose.msra.mxu0 0.0
    %1015 = vmatprep.subr.mxu0 0.0
    %1016 = vmatpush2.xpose.msra.mxu0 0.0
    %1017 = vmatprep.subr.mxu0 0.0
    %1018 = vmatpush2.xpose.msra.mxu0 0.0
    %1019 = vmatprep.subr.mxu0 0.0
    %1020 = vmatpush2.xpose.msra.mxu0 0.0
    %1021 = vmatprep.subr.mxu0 0.0
    %1022 = vmatpush2.xpose.msra.mxu0 0.0
    %1023 = vmatprep.subr.mxu0 0.0
    %1024 = vmatpush2.xpose.msra.mxu0 0.0
    %1025 = vmatprep.subr.mxu0 0.0
    %1026 = vmatpush2.xpose.msra.mxu0 0.0
    %1027 = vmatprep.subr.mxu0 0.0
    %1028 = vmatpush2.xpose.msra.mxu0 0.0
    %1029 = vmatprep.mubr.f32.mxu0 0.0
    %1030 = vmatmul.mubr.f32.gmra.mxu0 %v959
    %v1031 = vpop.f32.mrf.mxu0
    %v1032 = vadd.f32 0.0, %v1031
    %v1033 = vpop.f32.mrf.mxu0
    %1034 = vmatprep.mubr.f32.mxu0 0.0
    %1035 = vmatmul.mubr.f32.gmra.mxu0 %v961
    %v1036 = vpop.f32.mrf.mxu0
    %v1037 = vadd.f32 0.0, %v1036
    %v1038 = vpop.f32.mrf.mxu0
    %1039 = vdwg.mxu0
    %v1040 = vmul.f32 %v1032, 0.35355338
    %v1041 = vmul.f32 %v1037, 0.35355338
    %v1042 = vsel %vm617, %v1040, -inf
    %1043 = vmax.xlane.f32.xlu0 %v1042
    %v1044 = vpop.xlane.xlu0 %1043
    %v1045 = vsel %vm617, %v1041, -inf
    %1046 = vmax.xlane.f32.xlu0 %v1045
    %v1047 = vpop.xlane.xlu0 %1046
    %v1048 = vsub.f32 %v1040, %v1044
    %v1049 = vsub.f32 %v1041, %v1047
    %v1050 = vmul.f32 %v1048, 1.442695
    %v1051 = vpow.pop %v1050
    %v1052 = vmul.f32 %v1049, 1.442695
    %v1053 = vpow.pop %v1052
    %v1054 = vsel %vm617, %v1051, 0.0
    %1055 = vadd.xlane.f32.xlu0 %v1054
    %v1056 = vpop.xlane.xlu0 %1055
    %v1057 = vsel %vm617, %v1053, 0.0
    %1058 = vadd.xlane.f32.xlu0 %v1057
    %v1059 = vpop.xlane.xlu0 %1058
    %v1060 = vrcp.pop %v1056
    %v1061 = vrcp.pop %v1059
    %v1062 = vmul.f32 %v1051, %v1060
    %v1063 = vmul.f32 %v1053, %v1061
    %1065 = vrot.lane.b32.xlu0 %v365, 120
    %v1066 = vpop.permute.xlu0 %1065
    %v1069 = vsel %vm617, %v1062, 0
    %v1072 = vsel %vm617, %v1063, 0
    %1074 = vmatprep.subr.mxu0 0.0
    %1075 = vmatpush1.msra.mxu0 0.0
    %1076 = vmatprep.subr.mxu0 0.0
    %1077 = vmatpush1.msra.mxu0 0.0
    %1078 = vmatprep.subr.mxu0 0.0
    %1079 = vmatpush1.msra.mxu0 0.0
    %1080 = vmatprep.subr.mxu0 0.0
    %1081 = vmatpush1.msra.mxu0 0.0
    %1082 = vmatprep.subr.mxu0 0.0
    %1083 = vmatpush1.msra.mxu0 0.0
    %1084 = vmatprep.subr.mxu0 0.0
    %1085 = vmatpush1.msra.mxu0 0.0
    %1086 = vmatprep.subr.mxu0 0.0
    %1087 = vmatpush1.msra.mxu0 0.0
    %1088 = vmatprep.subr.mxu0 0.0
    %1089 = vmatpush1.msra.mxu0 0.0
    %1090 = vmatprep.subr.mxu0 0.0
    %1091 = vmatpush1.msra.mxu0 0.0
    %1092 = vmatprep.subr.mxu0 0.0
    %1093 = vmatpush1.msra.mxu0 0.0
    %1094 = vmatprep.subr.mxu0 0.0
    %1095 = vmatpush1.msra.mxu0 0.0
    %1096 = vmatprep.subr.mxu0 0.0
    %1097 = vmatpush1.msra.mxu0 0.0
    %1098 = vmatprep.subr.mxu0 0.0
    %1099 = vmatpush1.msra.mxu0 0.0
    %1100 = vmatprep.subr.mxu0 0.0
    %1101 = vmatpush1.msra.mxu0 0.0
    %1102 = vmatprep.subr.mxu0 0.0
    %1103 = vmatpush1.msra.mxu0 0.0
    %1104 = vmatprep.subr.mxu0 0.0
    %1105 = vmatpush1.msra.mxu0 %v1066
    %1106 = vmatprep.subr.mxu0 0.0
    %1107 = vmatpush2.msra.mxu0 0.0
    %1108 = vmatprep.subr.mxu0 0.0
    %1109 = vmatpush2.msra.mxu0 0.0
    %1110 = vmatprep.subr.mxu0 0.0
    %1111 = vmatpush2.msra.mxu0 0.0
    %1112 = vmatprep.subr.mxu0 0.0
    %1113 = vmatpush2.msra.mxu0 0.0
    %1114 = vmatprep.subr.mxu0 0.0
    %1115 = vmatpush2.msra.mxu0 0.0
    %1116 = vmatprep.subr.mxu0 0.0
    %1117 = vmatpush2.msra.mxu0 0.0
    %1118 = vmatprep.subr.mxu0 0.0
    %1119 = vmatpush2.msra.mxu0 0.0
    %1120 = vmatprep.subr.mxu0 0.0
    %1121 = vmatpush2.msra.mxu0 0.0
    %1122 = vmatprep.subr.mxu0 0.0
    %1123 = vmatpush2.msra.mxu0 0.0
    %1124 = vmatprep.subr.mxu0 0.0
    %1125 = vmatpush2.msra.mxu0 0.0
    %1126 = vmatprep.subr.mxu0 0.0
    %1127 = vmatpush2.msra.mxu0 0.0
    %1128 = vmatprep.subr.mxu0 0.0
    %1129 = vmatpush2.msra.mxu0 0.0
    %1130 = vmatprep.subr.mxu0 0.0
    %1131 = vmatpush2.msra.mxu0 0.0
    %1132 = vmatprep.subr.mxu0 0.0
    %1133 = vmatpush2.msra.mxu0 0.0
    %1134 = vmatprep.subr.mxu0 0.0
    %1135 = vmatpush2.msra.mxu0 0.0
    %1136 = vmatprep.subr.mxu0 0.0
    %1137 = vmatpush2.msra.mxu0 0.0
    %1138 = vmatprep.mubr.f32.mxu0 0.0
    %1139 = vmatmul.mubr.f32.gmra.mxu0 %v1069
    %v1140 = vpop.f32.mrf.mxu0
    %v1141 = vadd.f32 0.0, %v1140
    %v1142 = vpop.f32.mrf.mxu0
    %1143 = vmatprep.mubr.f32.mxu0 0.0
    %1144 = vmatmul.mubr.f32.gmra.mxu0 %v1072
    %v1145 = vpop.f32.mrf.mxu0
    %v1146 = vadd.f32 0.0, %v1145
    %v1147 = vpop.f32.mrf.mxu0
    %1148 = vdwg.mxu0
    %v1149 = vld [vmem:[%s10 + $0x10] sm:$0xff]
    %v1151 = vsel %vm617, %v1141, 0
    %1153 = vmatprep.subr.mxu0 0.0
    %1154 = vmatpush1.msra.mxu0 0.0
    %1155 = vmatprep.subr.mxu0 0.0
    %1156 = vmatpush1.msra.mxu0 0.0
    %1157 = vmatprep.subr.mxu0 0.0
    %1158 = vmatpush1.msra.mxu0 0.0
    %1159 = vmatprep.subr.mxu0 0.0
    %1160 = vmatpush1.msra.mxu0 0.0
    %1161 = vmatprep.subr.mxu0 0.0
    %1162 = vmatpush1.msra.mxu0 0.0
    %1163 = vmatprep.subr.mxu0 0.0
    %1164 = vmatpush1.msra.mxu0 0.0
    %1165 = vmatprep.subr.mxu0 0.0
    %1166 = vmatpush1.msra.mxu0 0.0
    %1167 = vmatprep.subr.mxu0 0.0
    %1168 = vmatpush1.msra.mxu0 0.0
    %1169 = vmatprep.subr.mxu0 0.0
    %1170 = vmatpush1.msra.mxu0 0.0
    %1171 = vmatprep.subr.mxu0 0.0
    %1172 = vmatpush1.msra.mxu0 0.0
    %1173 = vmatprep.subr.mxu0 0.0
    %1174 = vmatpush1.msra.mxu0 0.0
    %1175 = vmatprep.subr.mxu0 0.0
    %1176 = vmatpush1.msra.mxu0 0.0
    %1177 = vmatprep.subr.mxu0 0.0
    %1178 = vmatpush1.msra.mxu0 0.0
    %1179 = vmatprep.subr.mxu0 0.0
    %1180 = vmatpush1.msra.mxu0 0.0
    %1181 = vmatprep.subr.mxu0 0.0
    %1182 = vmatpush1.msra.mxu0 0.0
    %1183 = vmatprep.subr.mxu0 0.0
    %1184 = vmatpush1.msra.mxu0 %v1149
    %1185 = vmatprep.subr.mxu0 0.0
    %1186 = vmatpush2.msra.mxu0 0.0
    %1187 = vmatprep.subr.mxu0 0.0
    %1188 = vmatpush2.msra.mxu0 0.0
    %1189 = vmatprep.subr.mxu0 0.0
    %1190 = vmatpush2.msra.mxu0 0.0
    %1191 = vmatprep.subr.mxu0 0.0
    %1192 = vmatpush2.msra.mxu0 0.0
    %1193 = vmatprep.subr.mxu0 0.0
    %1194 = vmatpush2.msra.mxu0 0.0
    %1195 = vmatprep.subr.mxu0 0.0
    %1196 = vmatpush2.msra.mxu0 0.0
    %1197 = vmatprep.subr.mxu0 0.0
    %1198 = vmatpush2.msra.mxu0 0.0
    %1199 = vmatprep.subr.mxu0 0.0
    %1200 = vmatpush2.msra.mxu0 0.0
    %1201 = vmatprep.subr.mxu0 0.0
    %1202 = vmatpush2.msra.mxu0 0.0
    %1203 = vmatprep.subr.mxu0 0.0
    %1204 = vmatpush2.msra.mxu0 0.0
    %1205 = vmatprep.subr.mxu0 0.0
    %1206 = vmatpush2.msra.mxu0 0.0
    %1207 = vmatprep.subr.mxu0 0.0
    %1208 = vmatpush2.msra.mxu0 0.0
    %1209 = vmatprep.subr.mxu0 0.0
    %1210 = vmatpush2.msra.mxu0 0.0
    %1211 = vmatprep.subr.mxu0 0.0
    %1212 = vmatpush2.msra.mxu0 0.0
    %1213 = vmatprep.subr.mxu0 0.0
    %1214 = vmatpush2.msra.mxu0 0.0
    %1215 = vmatprep.subr.mxu0 0.0
    %1216 = vmatpush2.msra.mxu0 0.0
    %1217 = vmatprep.mubr.f32.mxu0 0.0
    %1218 = vmatmul.mubr.f32.gmra.mxu0 %v1151
    %v1219 = vpop.f32.mrf.mxu0
    %v1220 = vadd.f32 0.0, %v1219
    %v1221 = vpop.f32.mrf.mxu0
    %1222 = vdwg.mxu0
    %v1223 = vadd.f32 %v950, %v1220
    %v1224 = vld [vmem:[%s10 + $0x18] sm:$0xff]
    %v1226 = vsel %vm617, %v1146, 0
    %1228 = vmatprep.subr.mxu0 0.0
    %1229 = vmatpush1.msra.mxu0 0.0
    %1230 = vmatprep.subr.mxu0 0.0
    %1231 = vmatpush1.msra.mxu0 0.0
    %1232 = vmatprep.subr.mxu0 0.0
    %1233 = vmatpush1.msra.mxu0 0.0
    %1234 = vmatprep.subr.mxu0 0.0
    %1235 = vmatpush1.msra.mxu0 0.0
    %1236 = vmatprep.subr.mxu0 0.0
    %1237 = vmatpush1.msra.mxu0 0.0
    %1238 = vmatprep.subr.mxu0 0.0
    %1239 = vmatpush1.msra.mxu0 0.0
    %1240 = vmatprep.subr.mxu0 0.0
    %1241 = vmatpush1.msra.mxu0 0.0
    %1242 = vmatprep.subr.mxu0 0.0
    %1243 = vmatpush1.msra.mxu0 0.0
    %1244 = vmatprep.subr.mxu0 0.0
    %1245 = vmatpush1.msra.mxu0 0.0
    %1246 = vmatprep.subr.mxu0 0.0
    %1247 = vmatpush1.msra.mxu0 0.0
    %1248 = vmatprep.subr.mxu0 0.0
    %1249 = vmatpush1.msra.mxu0 0.0
    %1250 = vmatprep.subr.mxu0 0.0
    %1251 = vmatpush1.msra.mxu0 0.0
    %1252 = vmatprep.subr.mxu0 0.0
    %1253 = vmatpush1.msra.mxu0 0.0
    %1254 = vmatprep.subr.mxu0 0.0
    %1255 = vmatpush1.msra.mxu0 0.0
    %1256 = vmatprep.subr.mxu0 0.0
    %1257 = vmatpush1.msra.mxu0 0.0
    %1258 = vmatprep.subr.mxu0 0.0
    %1259 = vmatpush1.msra.mxu0 %v1224
    %1260 = vmatprep.subr.mxu0 0.0
    %1261 = vmatpush2.msra.mxu0 0.0
    %1262 = vmatprep.subr.mxu0 0.0
    %1263 = vmatpush2.msra.mxu0 0.0
    %1264 = vmatprep.subr.mxu0 0.0
    %1265 = vmatpush2.msra.mxu0 0.0
    %1266 = vmatprep.subr.mxu0 0.0
    %1267 = vmatpush2.msra.mxu0 0.0
    %1268 = vmatprep.subr.mxu0 0.0
    %1269 = vmatpush2.msra.mxu0 0.0
    %1270 = vmatprep.subr.mxu0 0.0
    %1271 = vmatpush2.msra.mxu0 0.0
    %1272 = vmatprep.subr.mxu0 0.0
    %1273 = vmatpush2.msra.mxu0 0.0
    %1274 = vmatprep.subr.mxu0 0.0
    %1275 = vmatpush2.msra.mxu0 0.0
    %1276 = vmatprep.subr.mxu0 0.0
    %1277 = vmatpush2.msra.mxu0 0.0
    %1278 = vmatprep.subr.mxu0 0.0
    %1279 = vmatpush2.msra.mxu0 0.0
    %1280 = vmatprep.subr.mxu0 0.0
    %1281 = vmatpush2.msra.mxu0 0.0
    %1282 = vmatprep.subr.mxu0 0.0
    %1283 = vmatpush2.msra.mxu0 0.0
    %1284 = vmatprep.subr.mxu0 0.0
    %1285 = vmatpush2.msra.mxu0 0.0
    %1286 = vmatprep.subr.mxu0 0.0
    %1287 = vmatpush2.msra.mxu0 0.0
    %1288 = vmatprep.subr.mxu0 0.0
    %1289 = vmatpush2.msra.mxu0 0.0
    %1290 = vmatprep.subr.mxu0 0.0
    %1291 = vmatpush2.msra.mxu0 0.0
    %1292 = vmatprep.mubr.f32.mxu0 0.0
    %1293 = vmatmul.mubr.f32.gmra.mxu0 %v1226
    %v1294 = vpop.f32.mrf.mxu0
    %v1295 = vadd.f32 0.0, %v1294
    %v1296 = vpop.f32.mrf.mxu0
    %1297 = vdwg.mxu0
    %v1298 = vadd.f32 %v1223, %v1295
    %1299 = vst.msk [vmem:[#allocation13] sm:$0xff] %vm133, %v1298
    %1301 = vrot.lane.b32.xlu0 %v520, 120
    %v1302 = vpop.permute.xlu0 %1301
    %v1303 = vsel %vm617, %v520, 0
    %v1305 = vsel %vm617, %v1302, 0
    %v1308 = vsel %vm617, %v613, 0
    %1310 = vmatprep.subr.mxu0 0.0
    %1311 = vmatpush1.xpose.msra.mxu0 0.0
    %1312 = vmatprep.subr.mxu0 0.0
    %1313 = vmatpush1.xpose.msra.mxu0 0.0
    %1314 = vmatprep.subr.mxu0 0.0
    %1315 = vmatpush1.xpose.msra.mxu0 0.0
    %1316 = vmatprep.subr.mxu0 0.0
    %1317 = vmatpush1.xpose.msra.mxu0 0.0
    %1318 = vmatprep.subr.mxu0 0.0
    %1319 = vmatpush1.xpose.msra.mxu0 0.0
    %1320 = vmatprep.subr.mxu0 0.0
    %1321 = vmatpush1.xpose.msra.mxu0 0.0
    %1322 = vmatprep.subr.mxu0 0.0
    %1323 = vmatpush1.xpose.msra.mxu0 0.0
    %1324 = vmatprep.subr.mxu0 0.0
    %1325 = vmatpush1.xpose.msra.mxu0 0.0
    %1326 = vmatprep.subr.mxu0 0.0
    %1327 = vmatpush1.xpose.msra.mxu0 0.0
    %1328 = vmatprep.subr.mxu0 0.0
    %1329 = vmatpush1.xpose.msra.mxu0 0.0
    %1330 = vmatprep.subr.mxu0 0.0
    %1331 = vmatpush1.xpose.msra.mxu0 0.0
    %1332 = vmatprep.subr.mxu0 0.0
    %1333 = vmatpush1.xpose.msra.mxu0 0.0
    %1334 = vmatprep.subr.mxu0 0.0
    %1335 = vmatpush1.xpose.msra.mxu0 0.0
    %1336 = vmatprep.subr.mxu0 0.0
    %1337 = vmatpush1.xpose.msra.mxu0 0.0
    %1338 = vmatprep.subr.mxu0 0.0
    %1339 = vmatpush1.xpose.msra.mxu0 0.0
    %1340 = vmatprep.subr.mxu0 0.0
    %1341 = vmatpush1.xpose.msra.mxu0 %v1308
    %1342 = vmatprep.subr.mxu0 0.0
    %1343 = vmatpush2.xpose.msra.mxu0 0.0
    %1344 = vmatprep.subr.mxu0 0.0
    %1345 = vmatpush2.xpose.msra.mxu0 0.0
    %1346 = vmatprep.subr.mxu0 0.0
    %1347 = vmatpush2.xpose.msra.mxu0 0.0
    %1348 = vmatprep.subr.mxu0 0.0
    %1349 = vmatpush2.xpose.msra.mxu0 0.0
    %1350 = vmatprep.subr.mxu0 0.0
    %1351 = vmatpush2.xpose.msra.mxu0 0.0
    %1352 = vmatprep.subr.mxu0 0.0
    %1353 = vmatpush2.xpose.msra.mxu0 0.0
    %1354 = vmatprep.subr.mxu0 0.0
    %1355 = vmatpush2.xpose.msra.mxu0 0.0
    %1356 = vmatprep.subr.mxu0 0.0
    %1357 = vmatpush2.xpose.msra.mxu0 0.0
    %1358 = vmatprep.subr.mxu0 0.0
    %1359 = vmatpush2.xpose.msra.mxu0 0.0
    %1360 = vmatprep.subr.mxu0 0.0
    %1361 = vmatpush2.xpose.msra.mxu0 0.0
    %1362 = vmatprep.subr.mxu0 0.0
    %1363 = vmatpush2.xpose.msra.mxu0 0.0
    %1364 = vmatprep.subr.mxu0 0.0
    %1365 = vmatpush2.xpose.msra.mxu0 0.0
    %1366 = vmatprep.subr.mxu0 0.0
    %1367 = vmatpush2.xpose.msra.mxu0 0.0
    %1368 = vmatprep.subr.mxu0 0.0
    %1369 = vmatpush2.xpose.msra.mxu0 0.0
    %1370 = vmatprep.subr.mxu0 0.0
    %1371 = vmatpush2.xpose.msra.mxu0 0.0
    %1372 = vmatprep.subr.mxu0 0.0
    %1373 = vmatpush2.xpose.msra.mxu0 0.0
    %1374 = vmatprep.mubr.f32.mxu0 0.0
    %1375 = vmatmul.mubr.f32.gmra.mxu0 %v1303
    %v1376 = vpop.f32.mrf.mxu0
    %v1377 = vadd.f32 0.0, %v1376
    %v1378 = vpop.f32.mrf.mxu0
    %1379 = vmatprep.mubr.f32.mxu0 0.0
    %1380 = vmatmul.mubr.f32.gmra.mxu0 %v1305
    %v1381 = vpop.f32.mrf.mxu0
    %v1382 = vadd.f32 0.0, %v1381
    %v1383 = vpop.f32.mrf.mxu0
    %1384 = vdwg.mxu0
    %v1385 = vmul.f32 %v1377, 0.35355338
    %v1386 = vmul.f32 %v1382, 0.35355338
    %v1387 = vsel %vm617, %v1385, -inf
    %1388 = vmax.xlane.f32.xlu0 %v1387
    %v1389 = vpop.xlane.xlu0 %1388
    %v1390 = vsel %vm617, %v1386, -inf
    %1391 = vmax.xlane.f32.xlu0 %v1390
    %v1392 = vpop.xlane.xlu0 %1391
    %v1393 = vsub.f32 %v1385, %v1389
    %v1394 = vsub.f32 %v1386, %v1392
    %v1395 = vmul.f32 %v1393, 1.442695
    %v1396 = vpow.pop %v1395
    %v1397 = vmul.f32 %v1394, 1.442695
    %v1398 = vpow.pop %v1397
    %v1399 = vsel %vm617, %v1396, 0.0
    %1400 = vadd.xlane.f32.xlu0 %v1399
    %v1401 = vpop.xlane.xlu0 %1400
    %v1402 = vsel %vm617, %v1398, 0.0
    %1403 = vadd.xlane.f32.xlu0 %v1402
    %v1404 = vpop.xlane.xlu0 %1403
    %v1405 = vrcp.pop %v1401
    %v1406 = vrcp.pop %v1404
    %v1407 = vmul.f32 %v1396, %v1405
    %v1408 = vmul.f32 %v1398, %v1406
    %v1410 = vsel %vm617, %v1407, 0
    %v1413 = vsel %vm617, %v1408, 0
    %1415 = vmatprep.subr.mxu0 0.0
    %1416 = vmatpush1.msra.mxu0 0.0
    %1417 = vmatprep.subr.mxu0 0.0
    %1418 = vmatpush1.msra.mxu0 0.0
    %1419 = vmatprep.subr.mxu0 0.0
    %1420 = vmatpush1.msra.mxu0 0.0
    %1421 = vmatprep.subr.mxu0 0.0
    %1422 = vmatpush1.msra.mxu0 0.0
    %1423 = vmatprep.subr.mxu0 0.0
    %1424 = vmatpush1.msra.mxu0 0.0
    %1425 = vmatprep.subr.mxu0 0.0
    %1426 = vmatpush1.msra.mxu0 0.0
    %1427 = vmatprep.subr.mxu0 0.0
    %1428 = vmatpush1.msra.mxu0 0.0
    %1429 = vmatprep.subr.mxu0 0.0
    %1430 = vmatpush1.msra.mxu0 0.0
    %1431 = vmatprep.subr.mxu0 0.0
    %1432 = vmatpush1.msra.mxu0 0.0
    %1433 = vmatprep.subr.mxu0 0.0
    %1434 = vmatpush1.msra.mxu0 0.0
    %1435 = vmatprep.subr.mxu0 0.0
    %1436 = vmatpush1.msra.mxu0 0.0
    %1437 = vmatprep.subr.mxu0 0.0
    %1438 = vmatpush1.msra.mxu0 0.0
    %1439 = vmatprep.subr.mxu0 0.0
    %1440 = vmatpush1.msra.mxu0 0.0
    %1441 = vmatprep.subr.mxu0 0.0
    %1442 = vmatpush1.msra.mxu0 0.0
    %1443 = vmatprep.subr.mxu0 0.0
    %1444 = vmatpush1.msra.mxu0 0.0
    %1445 = vmatprep.subr.mxu0 0.0
    %1446 = vmatpush1.msra.mxu0 %v370
    %1447 = vmatprep.subr.mxu0 0.0
    %1448 = vmatpush2.msra.mxu0 0.0
    %1449 = vmatprep.subr.mxu0 0.0
    %1450 = vmatpush2.msra.mxu0 0.0
    %1451 = vmatprep.subr.mxu0 0.0
    %1452 = vmatpush2.msra.mxu0 0.0
    %1453 = vmatprep.subr.mxu0 0.0
    %1454 = vmatpush2.msra.mxu0 0.0
    %1455 = vmatprep.subr.mxu0 0.0
    %1456 = vmatpush2.msra.mxu0 0.0
    %1457 = vmatprep.subr.mxu0 0.0
    %1458 = vmatpush2.msra.mxu0 0.0
    %1459 = vmatprep.subr.mxu0 0.0
    %1460 = vmatpush2.msra.mxu0 0.0
    %1461 = vmatprep.subr.mxu0 0.0
    %1462 = vmatpush2.msra.mxu0 0.0
    %1463 = vmatprep.subr.mxu0 0.0
    %1464 = vmatpush2.msra.mxu0 0.0
    %1465 = vmatprep.subr.mxu0 0.0
    %1466 = vmatpush2.msra.mxu0 0.0
    %1467 = vmatprep.subr.mxu0 0.0
    %1468 = vmatpush2.msra.mxu0 0.0
    %1469 = vmatprep.subr.mxu0 0.0
    %1470 = vmatpush2.msra.mxu0 0.0
    %1471 = vmatprep.subr.mxu0 0.0
    %1472 = vmatpush2.msra.mxu0 0.0
    %1473 = vmatprep.subr.mxu0 0.0
    %1474 = vmatpush2.msra.mxu0 0.0
    %1475 = vmatprep.subr.mxu0 0.0
    %1476 = vmatpush2.msra.mxu0 0.0
    %1477 = vmatprep.subr.mxu0 0.0
    %1478 = vmatpush2.msra.mxu0 0.0
    %1479 = vmatprep.mubr.f32.mxu0 0.0
    %1480 = vmatmul.mubr.f32.gmra.mxu0 %v1410
    %v1481 = vpop.f32.mrf.mxu0
    %v1482 = vadd.f32 0.0, %v1481
    %v1483 = vpop.f32.mrf.mxu0
    %1484 = vmatprep.mubr.f32.mxu0 0.0
    %1485 = vmatmul.mubr.f32.gmra.mxu0 %v1413
    %v1486 = vpop.f32.mrf.mxu0
    %v1487 = vadd.f32 0.0, %v1486
    %v1488 = vpop.f32.mrf.mxu0
    %1489 = vdwg.mxu0
    %v1490 = vld [vmem:[%s10] sm:$0xff]
    %v1491 = vld [vmem:[%s10 + $0x8] sm:$0xff]
    %v1493 = vsel %vm617, %v1487, 0
    %1495 = vmatprep.subr.mxu0 0.0
    %1496 = vmatpush1.msra.mxu0 0.0
    %1497 = vmatprep.subr.mxu0 0.0
    %1498 = vmatpush1.msra.mxu0 0.0
    %1499 = vmatprep.subr.mxu0 0.0
    %1500 = vmatpush1.msra.mxu0 0.0
    %1501 = vmatprep.subr.mxu0 0.0
    %1502 = vmatpush1.msra.mxu0 0.0
    %1503 = vmatprep.subr.mxu0 0.0
    %1504 = vmatpush1.msra.mxu0 0.0
    %1505 = vmatprep.subr.mxu0 0.0
    %1506 = vmatpush1.msra.mxu0 0.0
    %1507 = vmatprep.subr.mxu0 0.0
    %1508 = vmatpush1.msra.mxu0 0.0
    %1509 = vmatprep.subr.mxu0 0.0
    %1510 = vmatpush1.msra.mxu0 0.0
    %1511 = vmatprep.subr.mxu0 0.0
    %1512 = vmatpush1.msra.mxu0 0.0
    %1513 = vmatprep.subr.mxu0 0.0
    %1514 = vmatpush1.msra.mxu0 0.0
    %1515 = vmatprep.subr.mxu0 0.0
    %1516 = vmatpush1.msra.mxu0 0.0
    %1517 = vmatprep.subr.mxu0 0.0
    %1518 = vmatpush1.msra.mxu0 0.0
    %1519 = vmatprep.subr.mxu0 0.0
    %1520 = vmatpush1.msra.mxu0 0.0
    %1521 = vmatprep.subr.mxu0 0.0
    %1522 = vmatpush1.msra.mxu0 0.0
    %1523 = vmatprep.subr.mxu0 0.0
    %1524 = vmatpush1.msra.mxu0 0.0
    %1525 = vmatprep.subr.mxu0 0.0
    %1526 = vmatpush1.msra.mxu0 %v1491
    %1527 = vmatprep.subr.mxu0 0.0
    %1528 = vmatpush2.msra.mxu0 0.0
    %1529 = vmatprep.subr.mxu0 0.0
    %1530 = vmatpush2.msra.mxu0 0.0
    %1531 = vmatprep.subr.mxu0 0.0
    %1532 = vmatpush2.msra.mxu0 0.0
    %1533 = vmatprep.subr.mxu0 0.0
    %1534 = vmatpush2.msra.mxu0 0.0
    %1535 = vmatprep.subr.mxu0 0.0
    %1536 = vmatpush2.msra.mxu0 0.0
    %1537 = vmatprep.subr.mxu0 0.0
    %1538 = vmatpush2.msra.mxu0 0.0
    %1539 = vmatprep.subr.mxu0 0.0
    %1540 = vmatpush2.msra.mxu0 0.0
    %1541 = vmatprep.subr.mxu0 0.0
    %1542 = vmatpush2.msra.mxu0 0.0
    %1543 = vmatprep.subr.mxu0 0.0
    %1544 = vmatpush2.msra.mxu0 0.0
    %1545 = vmatprep.subr.mxu0 0.0
    %1546 = vmatpush2.msra.mxu0 0.0
    %1547 = vmatprep.subr.mxu0 0.0
    %1548 = vmatpush2.msra.mxu0 0.0
    %1549 = vmatprep.subr.mxu0 0.0
    %1550 = vmatpush2.msra.mxu0 0.0
    %1551 = vmatprep.subr.mxu0 0.0
    %1552 = vmatpush2.msra.mxu0 0.0
    %1553 = vmatprep.subr.mxu0 0.0
    %1554 = vmatpush2.msra.mxu0 0.0
    %1555 = vmatprep.subr.mxu0 0.0
    %1556 = vmatpush2.msra.mxu0 0.0
    %1557 = vmatprep.subr.mxu0 0.0
    %1558 = vmatpush2.msra.mxu0 0.0
    %1559 = vmatprep.mubr.f32.mxu0 0.0
    %1560 = vmatmul.mubr.f32.gmra.mxu0 %v1493
    %v1561 = vpop.f32.mrf.mxu0
    %v1562 = vadd.f32 0.0, %v1561
    %v1563 = vpop.f32.mrf.mxu0
    %1564 = vdwg.mxu0
    %v1566 = vsel %vm617, %v1482, 0
    %1568 = vmatprep.subr.mxu0 0.0
    %1569 = vmatpush1.msra.mxu0 0.0
    %1570 = vmatprep.subr.mxu0 0.0
    %1571 = vmatpush1.msra.mxu0 0.0
    %1572 = vmatprep.subr.mxu0 0.0
    %1573 = vmatpush1.msra.mxu0 0.0
    %1574 = vmatprep.subr.mxu0 0.0
    %1575 = vmatpush1.msra.mxu0 0.0
    %1576 = vmatprep.subr.mxu0 0.0
    %1577 = vmatpush1.msra.mxu0 0.0
    %1578 = vmatprep.subr.mxu0 0.0
    %1579 = vmatpush1.msra.mxu0 0.0
    %1580 = vmatprep.subr.mxu0 0.0
    %1581 = vmatpush1.msra.mxu0 0.0
    %1582 = vmatprep.subr.mxu0 0.0
    %1583 = vmatpush1.msra.mxu0 0.0
    %1584 = vmatprep.subr.mxu0 0.0
    %1585 = vmatpush1.msra.mxu0 0.0
    %1586 = vmatprep.subr.mxu0 0.0
    %1587 = vmatpush1.msra.mxu0 0.0
    %1588 = vmatprep.subr.mxu0 0.0
    %1589 = vmatpush1.msra.mxu0 0.0
    %1590 = vmatprep.subr.mxu0 0.0
    %1591 = vmatpush1.msra.mxu0 0.0
    %1592 = vmatprep.subr.mxu0 0.0
    %1593 = vmatpush1.msra.mxu0 0.0
    %1594 = vmatprep.subr.mxu0 0.0
    %1595 = vmatpush1.msra.mxu0 0.0
    %1596 = vmatprep.subr.mxu0 0.0
    %1597 = vmatpush1.msra.mxu0 0.0
    %1598 = vmatprep.subr.mxu0 0.0
    %1599 = vmatpush1.msra.mxu0 %v1490
    %1600 = vmatprep.subr.mxu0 0.0
    %1601 = vmatpush2.msra.mxu0 0.0
    %1602 = vmatprep.subr.mxu0 0.0
    %1603 = vmatpush2.msra.mxu0 0.0
    %1604 = vmatprep.subr.mxu0 0.0
    %1605 = vmatpush2.msra.mxu0 0.0
    %1606 = vmatprep.subr.mxu0 0.0
    %1607 = vmatpush2.msra.mxu0 0.0
    %1608 = vmatprep.subr.mxu0 0.0
    %1609 = vmatpush2.msra.mxu0 0.0
    %1610 = vmatprep.subr.mxu0 0.0
    %1611 = vmatpush2.msra.mxu0 0.0
    %1612 = vmatprep.subr.mxu0 0.0
    %1613 = vmatpush2.msra.mxu0 0.0
    %1614 = vmatprep.subr.mxu0 0.0
    %1615 = vmatpush2.msra.mxu0 0.0
    %1616 = vmatprep.subr.mxu0 0.0
    %1617 = vmatpush2.msra.mxu0 0.0
    %1618 = vmatprep.subr.mxu0 0.0
    %1619 = vmatpush2.msra.mxu0 0.0
    %1620 = vmatprep.subr.mxu0 0.0
    %1621 = vmatpush2.msra.mxu0 0.0
    %1622 = vmatprep.subr.mxu0 0.0
    %1623 = vmatpush2.msra.mxu0 0.0
    %1624 = vmatprep.subr.mxu0 0.0
    %1625 = vmatpush2.msra.mxu0 0.0
    %1626 = vmatprep.subr.mxu0 0.0
    %1627 = vmatpush2.msra.mxu0 0.0
    %1628 = vmatprep.subr.mxu0 0.0
    %1629 = vmatpush2.msra.mxu0 0.0
    %1630 = vmatprep.subr.mxu0 0.0
    %1631 = vmatpush2.msra.mxu0 0.0
    %1632 = vmatprep.mubr.f32.mxu0 0.0
    %1633 = vmatmul.mubr.f32.gmra.mxu0 %v1566
    %v1634 = vpop.f32.mrf.mxu0
    %v1635 = vadd.f32 %v1562, %v1634
    %v1636 = vpop.f32.mrf.mxu0
    %1637 = vdwg.mxu0
    %1638 = vrot.lane.b32.xlu0 %v520, 112
    %v1639 = vpop.permute.xlu0 %1638
    %1640 = vrot.lane.b32.xlu0 %v1302, 112
    %v1641 = vpop.permute.xlu0 %1640
    %1642 = vrot.lane.b32.xlu0 %v613, 120
    %v1643 = vpop.permute.xlu0 %1642
    %v1644 = vsel %vm617, %v1639, 0
    %v1646 = vsel %vm617, %v1641, 0
    %v1648 = vsel %vm617, %v1643, 0
    %1650 = vmatprep.subr.mxu0 0.0
    %1651 = vmatpush1.xpose.msra.mxu0 0.0
    %1652 = vmatprep.subr.mxu0 0.0
    %1653 = vmatpush1.xpose.msra.mxu0 0.0
    %1654 = vmatprep.subr.mxu0 0.0
    %1655 = vmatpush1.xpose.msra.mxu0 0.0
    %1656 = vmatprep.subr.mxu0 0.0
    %1657 = vmatpush1.xpose.msra.mxu0 0.0
    %1658 = vmatprep.subr.mxu0 0.0
    %1659 = vmatpush1.xpose.msra.mxu0 0.0
    %1660 = vmatprep.subr.mxu0 0.0
    %1661 = vmatpush1.xpose.msra.mxu0 0.0
    %1662 = vmatprep.subr.mxu0 0.0
    %1663 = vmatpush1.xpose.msra.mxu0 0.0
    %1664 = vmatprep.subr.mxu0 0.0
    %1665 = vmatpush1.xpose.msra.mxu0 0.0
    %1666 = vmatprep.subr.mxu0 0.0
    %1667 = vmatpush1.xpose.msra.mxu0 0.0
    %1668 = vmatprep.subr.mxu0 0.0
    %1669 = vmatpush1.xpose.msra.mxu0 0.0
    %1670 = vmatprep.subr.mxu0 0.0
    %1671 = vmatpush1.xpose.msra.mxu0 0.0
    %1672 = vmatprep.subr.mxu0 0.0
    %1673 = vmatpush1.xpose.msra.mxu0 0.0
    %1674 = vmatprep.subr.mxu0 0.0
    %1675 = vmatpush1.xpose.msra.mxu0 0.0
    %1676 = vmatprep.subr.mxu0 0.0
    %1677 = vmatpush1.xpose.msra.mxu0 0.0
    %1678 = vmatprep.subr.mxu0 0.0
    %1679 = vmatpush1.xpose.msra.mxu0 0.0
    %1680 = vmatprep.subr.mxu0 0.0
    %1681 = vmatpush1.xpose.msra.mxu0 %v1648
    %1682 = vmatprep.subr.mxu0 0.0
    %1683 = vmatpush2.xpose.msra.mxu0 0.0
    %1684 = vmatprep.subr.mxu0 0.0
    %1685 = vmatpush2.xpose.msra.mxu0 0.0
    %1686 = vmatprep.subr.mxu0 0.0
    %1687 = vmatpush2.xpose.msra.mxu0 0.0
    %1688 = vmatprep.subr.mxu0 0.0
    %1689 = vmatpush2.xpose.msra.mxu0 0.0
    %1690 = vmatprep.subr.mxu0 0.0
    %1691 = vmatpush2.xpose.msra.mxu0 0.0
    %1692 = vmatprep.subr.mxu0 0.0
    %1693 = vmatpush2.xpose.msra.mxu0 0.0
    %1694 = vmatprep.subr.mxu0 0.0
    %1695 = vmatpush2.xpose.msra.mxu0 0.0
    %1696 = vmatprep.subr.mxu0 0.0
    %1697 = vmatpush2.xpose.msra.mxu0 0.0
    %1698 = vmatprep.subr.mxu0 0.0
    %1699 = vmatpush2.xpose.msra.mxu0 0.0
    %1700 = vmatprep.subr.mxu0 0.0
    %1701 = vmatpush2.xpose.msra.mxu0 0.0
    %1702 = vmatprep.subr.mxu0 0.0
    %1703 = vmatpush2.xpose.msra.mxu0 0.0
    %1704 = vmatprep.subr.mxu0 0.0
    %1705 = vmatpush2.xpose.msra.mxu0 0.0
    %1706 = vmatprep.subr.mxu0 0.0
    %1707 = vmatpush2.xpose.msra.mxu0 0.0
    %1708 = vmatprep.subr.mxu0 0.0
    %1709 = vmatpush2.xpose.msra.mxu0 0.0
    %1710 = vmatprep.subr.mxu0 0.0
    %1711 = vmatpush2.xpose.msra.mxu0 0.0
    %1712 = vmatprep.subr.mxu0 0.0
    %1713 = vmatpush2.xpose.msra.mxu0 0.0
    %1714 = vmatprep.mubr.f32.mxu0 0.0
    %1715 = vmatmul.mubr.f32.gmra.mxu0 %v1644
    %v1716 = vpop.f32.mrf.mxu0
    %v1717 = vadd.f32 0.0, %v1716
    %v1718 = vpop.f32.mrf.mxu0
    %1719 = vmatprep.mubr.f32.mxu0 0.0
    %1720 = vmatmul.mubr.f32.gmra.mxu0 %v1646
    %v1721 = vpop.f32.mrf.mxu0
    %v1722 = vadd.f32 0.0, %v1721
    %v1723 = vpop.f32.mrf.mxu0
    %1724 = vdwg.mxu0
    %v1725 = vmul.f32 %v1717, 0.35355338
    %v1726 = vmul.f32 %v1722, 0.35355338
    %v1727 = vsel %vm617, %v1725, -inf
    %1728 = vmax.xlane.f32.xlu0 %v1727
    %v1729 = vpop.xlane.xlu0 %1728
    %v1730 = vsel %vm617, %v1726, -inf
    %1731 = vmax.xlane.f32.xlu0 %v1730
    %v1732 = vpop.xlane.xlu0 %1731
    %v1733 = vsub.f32 %v1725, %v1729
    %v1734 = vsub.f32 %v1726, %v1732
    %v1735 = vmul.f32 %v1733, 1.442695
    %v1736 = vpow.pop %v1735
    %v1737 = vmul.f32 %v1734, 1.442695
    %v1738 = vpow.pop %v1737
    %v1739 = vsel %vm617, %v1736, 0.0
    %1740 = vadd.xlane.f32.xlu0 %v1739
    %v1741 = vpop.xlane.xlu0 %1740
    %v1742 = vsel %vm617, %v1738, 0.0
    %1743 = vadd.xlane.f32.xlu0 %v1742
    %v1744 = vpop.xlane.xlu0 %1743
    %v1745 = vrcp.pop %v1741
    %v1746 = vrcp.pop %v1744
    %v1747 = vmul.f32 %v1736, %v1745
    %v1748 = vmul.f32 %v1738, %v1746
    %1750 = vrot.lane.b32.xlu0 %v370, 120
    %v1751 = vpop.permute.xlu0 %1750
    %v1754 = vsel %vm617, %v1747, 0
    %v1757 = vsel %vm617, %v1748, 0
    %1759 = vmatprep.subr.mxu0 0.0
    %1760 = vmatpush1.msra.mxu0 0.0
    %1761 = vmatprep.subr.mxu0 0.0
    %1762 = vmatpush1.msra.mxu0 0.0
    %1763 = vmatprep.subr.mxu0 0.0
    %1764 = vmatpush1.msra.mxu0 0.0
    %1765 = vmatprep.subr.mxu0 0.0
    %1766 = vmatpush1.msra.mxu0 0.0
    %1767 = vmatprep.subr.mxu0 0.0
    %1768 = vmatpush1.msra.mxu0 0.0
    %1769 = vmatprep.subr.mxu0 0.0
    %1770 = vmatpush1.msra.mxu0 0.0
    %1771 = vmatprep.subr.mxu0 0.0
    %1772 = vmatpush1.msra.mxu0 0.0
    %1773 = vmatprep.subr.mxu0 0.0
    %1774 = vmatpush1.msra.mxu0 0.0
    %1775 = vmatprep.subr.mxu0 0.0
    %1776 = vmatpush1.msra.mxu0 0.0
    %1777 = vmatprep.subr.mxu0 0.0
    %1778 = vmatpush1.msra.mxu0 0.0
    %1779 = vmatprep.subr.mxu0 0.0
    %1780 = vmatpush1.msra.mxu0 0.0
    %1781 = vmatprep.subr.mxu0 0.0
    %1782 = vmatpush1.msra.mxu0 0.0
    %1783 = vmatprep.subr.mxu0 0.0
    %1784 = vmatpush1.msra.mxu0 0.0
    %1785 = vmatprep.subr.mxu0 0.0
    %1786 = vmatpush1.msra.mxu0 0.0
    %1787 = vmatprep.subr.mxu0 0.0
    %1788 = vmatpush1.msra.mxu0 0.0
    %1789 = vmatprep.subr.mxu0 0.0
    %1790 = vmatpush1.msra.mxu0 %v1751
    %1791 = vmatprep.subr.mxu0 0.0
    %1792 = vmatpush2.msra.mxu0 0.0
    %1793 = vmatprep.subr.mxu0 0.0
    %1794 = vmatpush2.msra.mxu0 0.0
    %1795 = vmatprep.subr.mxu0 0.0
    %1796 = vmatpush2.msra.mxu0 0.0
    %1797 = vmatprep.subr.mxu0 0.0
    %1798 = vmatpush2.msra.mxu0 0.0
    %1799 = vmatprep.subr.mxu0 0.0
    %1800 = vmatpush2.msra.mxu0 0.0
    %1801 = vmatprep.subr.mxu0 0.0
    %1802 = vmatpush2.msra.mxu0 0.0
    %1803 = vmatprep.subr.mxu0 0.0
    %1804 = vmatpush2.msra.mxu0 0.0
    %1805 = vmatprep.subr.mxu0 0.0
    %1806 = vmatpush2.msra.mxu0 0.0
    %1807 = vmatprep.subr.mxu0 0.0
    %1808 = vmatpush2.msra.mxu0 0.0
    %1809 = vmatprep.subr.mxu0 0.0
    %1810 = vmatpush2.msra.mxu0 0.0
    %1811 = vmatprep.subr.mxu0 0.0
    %1812 = vmatpush2.msra.mxu0 0.0
    %1813 = vmatprep.subr.mxu0 0.0
    %1814 = vmatpush2.msra.mxu0 0.0
    %1815 = vmatprep.subr.mxu0 0.0
    %1816 = vmatpush2.msra.mxu0 0.0
    %1817 = vmatprep.subr.mxu0 0.0
    %1818 = vmatpush2.msra.mxu0 0.0
    %1819 = vmatprep.subr.mxu0 0.0
    %1820 = vmatpush2.msra.mxu0 0.0
    %1821 = vmatprep.subr.mxu0 0.0
    %1822 = vmatpush2.msra.mxu0 0.0
    %1823 = vmatprep.mubr.f32.mxu0 0.0
    %1824 = vmatmul.mubr.f32.gmra.mxu0 %v1754
    %v1825 = vpop.f32.mrf.mxu0
    %v1826 = vadd.f32 0.0, %v1825
    %v1827 = vpop.f32.mrf.mxu0
    %1828 = vmatprep.mubr.f32.mxu0 0.0
    %1829 = vmatmul.mubr.f32.gmra.mxu0 %v1757
    %v1830 = vpop.f32.mrf.mxu0
    %v1831 = vadd.f32 0.0, %v1830
    %v1832 = vpop.f32.mrf.mxu0
    %1833 = vdwg.mxu0
    %v1834 = vld [vmem:[%s10 + $0x10] sm:$0xff]
    %v1836 = vsel %vm617, %v1826, 0
    %1838 = vmatprep.subr.mxu0 0.0
    %1839 = vmatpush1.msra.mxu0 0.0
    %1840 = vmatprep.subr.mxu0 0.0
    %1841 = vmatpush1.msra.mxu0 0.0
    %1842 = vmatprep.subr.mxu0 0.0
    %1843 = vmatpush1.msra.mxu0 0.0
    %1844 = vmatprep.subr.mxu0 0.0
    %1845 = vmatpush1.msra.mxu0 0.0
    %1846 = vmatprep.subr.mxu0 0.0
    %1847 = vmatpush1.msra.mxu0 0.0
    %1848 = vmatprep.subr.mxu0 0.0
    %1849 = vmatpush1.msra.mxu0 0.0
    %1850 = vmatprep.subr.mxu0 0.0
    %1851 = vmatpush1.msra.mxu0 0.0
    %1852 = vmatprep.subr.mxu0 0.0
    %1853 = vmatpush1.msra.mxu0 0.0
    %1854 = vmatprep.subr.mxu0 0.0
    %1855 = vmatpush1.msra.mxu0 0.0
    %1856 = vmatprep.subr.mxu0 0.0
    %1857 = vmatpush1.msra.mxu0 0.0
    %1858 = vmatprep.subr.mxu0 0.0
    %1859 = vmatpush1.msra.mxu0 0.0
    %1860 = vmatprep.subr.mxu0 0.0
    %1861 = vmatpush1.msra.mxu0 0.0
    %1862 = vmatprep.subr.mxu0 0.0
    %1863 = vmatpush1.msra.mxu0 0.0
    %1864 = vmatprep.subr.mxu0 0.0
    %1865 = vmatpush1.msra.mxu0 0.0
    %1866 = vmatprep.subr.mxu0 0.0
    %1867 = vmatpush1.msra.mxu0 0.0
    %1868 = vmatprep.subr.mxu0 0.0
    %1869 = vmatpush1.msra.mxu0 %v1834
    %1870 = vmatprep.subr.mxu0 0.0
    %1871 = vmatpush2.msra.mxu0 0.0
    %1872 = vmatprep.subr.mxu0 0.0
    %1873 = vmatpush2.msra.mxu0 0.0
    %1874 = vmatprep.subr.mxu0 0.0
    %1875 = vmatpush2.msra.mxu0 0.0
    %1876 = vmatprep.subr.mxu0 0.0
    %1877 = vmatpush2.msra.mxu0 0.0
    %1878 = vmatprep.subr.mxu0 0.0
    %1879 = vmatpush2.msra.mxu0 0.0
    %1880 = vmatprep.subr.mxu0 0.0
    %1881 = vmatpush2.msra.mxu0 0.0
    %1882 = vmatprep.subr.mxu0 0.0
    %1883 = vmatpush2.msra.mxu0 0.0
    %1884 = vmatprep.subr.mxu0 0.0
    %1885 = vmatpush2.msra.mxu0 0.0
    %1886 = vmatprep.subr.mxu0 0.0
    %1887 = vmatpush2.msra.mxu0 0.0
    %1888 = vmatprep.subr.mxu0 0.0
    %1889 = vmatpush2.msra.mxu0 0.0
    %1890 = vmatprep.subr.mxu0 0.0
    %1891 = vmatpush2.msra.mxu0 0.0
    %1892 = vmatprep.subr.mxu0 0.0
    %1893 = vmatpush2.msra.mxu0 0.0
    %1894 = vmatprep.subr.mxu0 0.0
    %1895 = vmatpush2.msra.mxu0 0.0
    %1896 = vmatprep.subr.mxu0 0.0
    %1897 = vmatpush2.msra.mxu0 0.0
    %1898 = vmatprep.subr.mxu0 0.0
    %1899 = vmatpush2.msra.mxu0 0.0
    %1900 = vmatprep.subr.mxu0 0.0
    %1901 = vmatpush2.msra.mxu0 0.0
    %1902 = vmatprep.mubr.f32.mxu0 0.0
    %1903 = vmatmul.mubr.f32.gmra.mxu0 %v1836
    %v1904 = vpop.f32.mrf.mxu0
    %v1905 = vadd.f32 0.0, %v1904
    %v1906 = vpop.f32.mrf.mxu0
    %1907 = vdwg.mxu0
    %v1908 = vadd.f32 %v1635, %v1905
    %v1909 = vld [vmem:[%s10 + $0x18] sm:$0xff]
    %v1911 = vsel %vm617, %v1831, 0
    %1913 = vmatprep.subr.mxu0 0.0
    %1914 = vmatpush1.msra.mxu0 0.0
    %1915 = vmatprep.subr.mxu0 0.0
    %1916 = vmatpush1.msra.mxu0 0.0
    %1917 = vmatprep.subr.mxu0 0.0
    %1918 = vmatpush1.msra.mxu0 0.0
    %1919 = vmatprep.subr.mxu0 0.0
    %1920 = vmatpush1.msra.mxu0 0.0
    %1921 = vmatprep.subr.mxu0 0.0
    %1922 = vmatpush1.msra.mxu0 0.0
    %1923 = vmatprep.subr.mxu0 0.0
    %1924 = vmatpush1.msra.mxu0 0.0
    %1925 = vmatprep.subr.mxu0 0.0
    %1926 = vmatpush1.msra.mxu0 0.0
    %1927 = vmatprep.subr.mxu0 0.0
    %1928 = vmatpush1.msra.mxu0 0.0
    %1929 = vmatprep.subr.mxu0 0.0
    %1930 = vmatpush1.msra.mxu0 0.0
    %1931 = vmatprep.subr.mxu0 0.0
    %1932 = vmatpush1.msra.mxu0 0.0
    %1933 = vmatprep.subr.mxu0 0.0
    %1934 = vmatpush1.msra.mxu0 0.0
    %1935 = vmatprep.subr.mxu0 0.0
    %1936 = vmatpush1.msra.mxu0 0.0
    %1937 = vmatprep.subr.mxu0 0.0
    %1938 = vmatpush1.msra.mxu0 0.0
    %1939 = vmatprep.subr.mxu0 0.0
    %1940 = vmatpush1.msra.mxu0 0.0
    %1941 = vmatprep.subr.mxu0 0.0
    %1942 = vmatpush1.msra.mxu0 0.0
    %1943 = vmatprep.subr.mxu0 0.0
    %1944 = vmatpush1.msra.mxu0 %v1909
    %1945 = vmatprep.subr.mxu0 0.0
    %1946 = vmatpush2.msra.mxu0 0.0
    %1947 = vmatprep.subr.mxu0 0.0
    %1948 = vmatpush2.msra.mxu0 0.0
    %1949 = vmatprep.subr.mxu0 0.0
    %1950 = vmatpush2.msra.mxu0 0.0
    %1951 = vmatprep.subr.mxu0 0.0
    %1952 = vmatpush2.msra.mxu0 0.0
    %1953 = vmatprep.subr.mxu0 0.0
    %1954 = vmatpush2.msra.mxu0 0.0
    %1955 = vmatprep.subr.mxu0 0.0
    %1956 = vmatpush2.msra.mxu0 0.0
    %1957 = vmatprep.subr.mxu0 0.0
    %1958 = vmatpush2.msra.mxu0 0.0
    %1959 = vmatprep.subr.mxu0 0.0
    %1960 = vmatpush2.msra.mxu0 0.0
    %1961 = vmatprep.subr.mxu0 0.0
    %1962 = vmatpush2.msra.mxu0 0.0
    %1963 = vmatprep.subr.mxu0 0.0
    %1964 = vmatpush2.msra.mxu0 0.0
    %1965 = vmatprep.subr.mxu0 0.0
    %1966 = vmatpush2.msra.mxu0 0.0
    %1967 = vmatprep.subr.mxu0 0.0
    %1968 = vmatpush2.msra.mxu0 0.0
    %1969 = vmatprep.subr.mxu0 0.0
    %1970 = vmatpush2.msra.mxu0 0.0
    %1971 = vmatprep.subr.mxu0 0.0
    %1972 = vmatpush2.msra.mxu0 0.0
    %1973 = vmatprep.subr.mxu0 0.0
    %1974 = vmatpush2.msra.mxu0 0.0
    %1975 = vmatprep.subr.mxu0 0.0
    %1976 = vmatpush2.msra.mxu0 0.0
    %1977 = vmatprep.mubr.f32.mxu0 0.0
    %1978 = vmatmul.mubr.f32.gmra.mxu0 %v1911
    %v1979 = vpop.f32.mrf.mxu0
    %v1980 = vadd.f32 0.0, %v1979
    %v1981 = vpop.f32.mrf.mxu0
    %1982 = vdwg.mxu0
    %v1983 = vadd.f32 %v1908, %v1980
    %1984 = vst.msk [vmem:[#allocation13 + $0x8] sm:$0xff] %vm133, %v1983
    // Predicated region
    $region78: #{tpu_custom_call.1} parent=1 // pred_check
      _
    $region79: #{tpu_custom_call.1} parent=1 // pred_check_branch
      %1986 = sbr.rel (0) target = $region81
    $region80: #{tpu_custom_call.1} parent=1 // pred_region
      %s1988 = ssub.s32 256, 256
      %1989 = vsyncadd [#allocation4], %s1988
      %s1990 = sshll.u32 [#allocation13], 4
      %s1991 = int_to_ptr.vmem [resolvable:$true] %s1990
      %1996 = dma.vmem_to_hbm [thread:$0]  %s1991, 256, %s13, [#allocation4], 128, 128, 8
    $region81: #{tpu_custom_call.1} parent=1 // pred_fallthru
      _
    // Predicated region
    $region82: #{tpu_custom_call.1} parent=1 // pred_check
      _
    $region83: #{tpu_custom_call.1} parent=1 // pred_check_branch
      %1998 = sbr.rel (0) target = $region85
    $region84: #{tpu_custom_call.1} parent=1 // pred_region
      %1999 = dma.done [#allocation4], 256
    $region85: #{tpu_custom_call.1} parent=1 // pred_fallthru
      _
    %2000 = vsyncpa [#allocation3], 1
    %2001 = vsyncpa [#allocation6], 1
    %2002 = vsyncpa [#allocation9], 1
    %2003 = vsyncpa [#allocation12], 1
    %2004 = vsyncpa [#allocation4], 1

</llo_original>
